<compile_context>
chip_gen: v6e
topology: v6e:2x2x1
jax: 0.10.0
libtpu: 0.0.40
codegen_flags: <defaults>
</compile_context>

<pallas_src>
import functools

import jax
import jax.numpy as jnp
from jax import lax
from jax.experimental import pallas as pl
from jax.experimental.pallas import tpu as pltpu


def _vmem_limit_bytes():
    """Generation-aware scoped-VMEM budget (128 MiB physical on v5e/v6e, 64 MiB on v7x)."""
    try:
        cap = int(pltpu.get_tpu_info().vmem_capacity_bytes)
    except Exception:
        cap = 64 * 1024 * 1024
    return max(32 * 1024 * 1024, min((cap * 3) // 4, 100 * 1024 * 1024))


# ----------------------------- in-kernel helpers -----------------------------

def _shift2(a, dr, dc, fill):
    """b[r, c] = a[r + dr, c + dc]; `fill` outside bounds (static shifts only)."""
    R, C = a.shape
    out = a
    if dr > 0:
        out = jnp.concatenate([out[dr:, :], jnp.full((dr, C), fill, out.dtype)], axis=0)
    elif dr < 0:
        out = jnp.concatenate([jnp.full((-dr, C), fill, out.dtype), out[:R + dr, :]], axis=0)
    if dc > 0:
        out = jnp.concatenate([out[:, dc:], jnp.full((R, dc), fill, out.dtype)], axis=1)
    elif dc < 0:
        out = jnp.concatenate([jnp.full((R, -dc), fill, out.dtype), out[:, :C + dc]], axis=1)
    return out


def _conv_same(x, band, K):
    """KxK SAME conv on a row-flattened (rows, W*Cin) tile as ONE MXU matmul.

    The K vertical taps are stacked along lanes: x_cat[r] = [x[r-p] | ... | x[r+p]] (zero
    outside the image); `band` is the matching (K*W*Cin, W*Cout) block-banded bf16 weight
    (kx taps + W zero padding folded into the matrix). f32 accumulation.
    """
    p = K // 2
    parts = [_shift2(x, ky - p, 0, 0.0) for ky in range(K)]
    xcat = parts[0] if K == 1 else jnp.concatenate(parts, axis=1)
    return jnp.dot(xcat, band, preferred_element_type=jnp.float32)


def _maxpool3(x, cin, sel_h, sel_w):
    """3x3 / pad=1 / stride=s max pool on a row-flattened (H, W*Cin) bf16 image.

    Separable max (2 lane shifts + 2 row shifts), bf16 throughout (exact for bf16 inputs),
    then exact 0/1 bf16 selection matmuls decimate rows / lane blocks; only the strided
    result is returned (never leaves VMEM).
    """
    neg = float("-inf")
    m = jnp.maximum(jnp.maximum(_shift2(x, 0, cin, neg), x), _shift2(x, 0, -cin, neg))
    m = jnp.maximum(jnp.maximum(_shift2(m, 1, 0, neg), m), _shift2(m, -1, 0, neg))
    m = jnp.dot(sel_h, m, preferred_element_type=jnp.float32).astype(x.dtype)   # H decimation
    m = jnp.dot(m, sel_w, preferred_element_type=jnp.float32).astype(x.dtype)   # W decimation
    return m


# ------------------------------- fused kernel --------------------------------

def _fused_kernel(*refs, K, cin, has_pool, Hp, pack_rows):
    """Whole MinkConv2D forward for one batch image, entirely in VMEM.

    refs = (x, [sel_h, sel_w],
            w1, w21, b21, w22, w31, b31, w32, b32, w33, fin_b, out)
      x       : (1, H, W*Cin) bf16 row-flattened channels-last image
      sel_h/w : 0/1 bf16 decimation matrices for the strided max pool
      w*      : (K*W*C, W*C') bf16 stacked banded conv weights (BN scales pre-folded)
      b*      : (1, W*C) f32 per-channel biases tiled along W (folded BN shifts)
      out     : (1, Hp/2, 2*Wp*Cout) f32 if pack_rows else (1, Hp, Wp*Cout) f32
    """
    refs = list(refs)
    out_ref = refs.pop()
    it = iter(refs)
    x_ref = next(it)
    if has_pool:
        sh_ref, sw_ref = next(it), next(it)
    w1 = next(it)
    w21, b21, w22 = next(it), next(it), next(it)
    w31, b31, w32, b32, w33 = next(it), next(it), next(it), next(it), next(it)
    fb = next(it)

    x = x_ref[0]                                                    # (H, W*Cin) bf16
    if has_pool:
        x = _maxpool3(x, cin, sh_ref[...], sw_ref[...])             # (Hp, Wp*Cin) bf16

    def act(a_f32, b_ref):                                          # BN shift + ReLU -> bf16
        return jnp.maximum(a_f32 + b_ref[...], 0.0).astype(jnp.bfloat16)

    # layer1 / layer2 / layer3 branches (final-BN scale already folded into their last convs)
    x1 = _conv_same(x, w1[...], K)                                  # (Hp, Wp*Co) f32
    x2 = _conv_same(act(_conv_same(x, w21[...], K), b21), w22[...], K)
    h = act(_conv_same(x, w31[...], K), b31)
    h = act(_conv_same(h, w32[...], K), b32)
    x3 = _conv_same(h, w33[...], K)

    out = jnp.maximum(x1 + x2 + x3 + fb[...], 0.0)                  # layer_final (bias + ReLU)
    if pack_rows:                                                   # lane-dense (>=128) store
        half = Hp // 2
        out = jnp.concatenate([out[:half, :], out[half:, :]], axis=1)
    out_ref[0] = out.astype(out_ref.dtype)


# ------------------------------ forward wrapper -------------------------------

_WEIGHT_KEYS = ("l1_band", "l2_band1", "l2_b1", "l2_band2",
                "l3_band1", "l3_b1", "l3_band2", "l3_b2", "l3_band3", "fin_brow")


def minkconv2d_forward(prep, x_nchw, stride):
    """Mirrors MinkConv2D.forward on a dense grid; returns (None, out) with out in NCHW."""
    B, cin, H, W = x_nchw.shape
    Hp, Wp = (H // stride, W // stride) if stride != 1 else (H, W)
    co = prep["fin_brow"].shape[1] // Wp                  # static (derived from shapes)
    K = prep["l1_band"].shape[0] // (Wp * cin)
    pack_rows = (Hp % 2 == 0) and (Wp * co < 128)

    x = jnp.transpose(x_nchw, (0, 2, 3, 1)).astype(jnp.bfloat16)
    x = x.reshape(B, H, W * cin)                          # row-flattened NHWC (lane-dense)

    args = [x]
    in_specs = [pl.BlockSpec((1, H, W * cin), lambda b: (b, 0, 0))]
    if stride != 1:
        for name in ("sel_h", "sel_w"):
            args.append(prep[name])
            in_specs.append(pl.BlockSpec(prep[name].shape, lambda b: (0, 0)))
    for name in _WEIGHT_KEYS:
        args.append(prep[name])
        in_specs.append(pl.BlockSpec(prep[name].shape, lambda b: (0, 0)))

    if pack_rows:
        out_shape = jax.ShapeDtypeStruct((B, Hp // 2, 2 * Wp * co), jnp.float32)
        out_spec = pl.BlockSpec((1, Hp // 2, 2 * Wp * co), lambda b: (b, 0, 0))
    else:
        out_shape = jax.ShapeDtypeStruct((B, Hp, Wp * co), jnp.float32)
        out_spec = pl.BlockSpec((1, Hp, Wp * co), lambda b: (b, 0, 0))

    vmem_limit = _vmem_limit_bytes()
    arg_bytes = sum(a.size * a.dtype.itemsize for a in args)       # double-buffered params
    live_bytes = 16 * Hp * Wp * max(cin, 2 * co) * 4               # rough live-value bound
    assert 2 * arg_bytes + live_bytes < vmem_limit, "fused kernel would overflow VMEM"

    kern = functools.partial(_fused_kernel, K=K, cin=cin, has_pool=(stride != 1),
                             Hp=Hp, pack_rows=pack_rows)
    out = pl.pallas_call(
        kern,
        out_shape=out_shape,
        grid=(B,),                       # "parallel": feeds both v7x TensorCores when B >= 2
        in_specs=in_specs,
        out_specs=out_spec,
        compiler_params=pltpu.CompilerParams(
            dimension_semantics=("parallel",),
            vmem_limit_bytes=vmem_limit),
    )(*args)

    if pack_rows:                        # unpack fuses with the NCHW transpose below
        wc = Wp * co
        out = jnp.concatenate([out[..., :wc], out[..., wc:]], axis=1)
    out = jnp.transpose(out.reshape(B, Hp, Wp, co), (0, 3, 1, 2))   # -> NCHW
    return None, out


# --------------------------- parameters / folding ----------------------------

def _fold_bn(gamma, beta, mean, var, eps=1e-5):
    scale = gamma / jnp.sqrt(var + eps)
    bias = beta - mean * scale
    return scale, bias


def init_params(key, in_planes, out_planes, K):
    """Deterministic synthetic params matching MinkConv2D.__init__ shapes (HWIO weights)."""
    def conv_w(k, cin, cout):
        return (jax.random.normal(k, (K, K, cin, cout), jnp.float32)
                / jnp.sqrt(float(K * K * cin)))

    def bn(k, c):
        k1, k2, k3, k4 = jax.random.split(k, 4)
        gamma = jax.random.uniform(k1, (c,), jnp.float32, 0.5, 1.5)
        beta = 0.1 * jax.random.normal(k2, (c,), jnp.float32)
        mean = 0.1 * jax.random.normal(k3, (c,), jnp.float32)
        var = jax.random.uniform(k4, (c,), jnp.float32, 0.5, 1.5)
        return _fold_bn(gamma, beta, mean, var)

    ks = jax.random.split(key, 10)
    op2 = out_planes * 2
    p = {}
    p["l1_w"] = conv_w(ks[0], in_planes, out_planes)
    p["l2_w1"] = conv_w(ks[1], in_planes, op2)
    p["l2_bn1"] = bn(ks[2], op2)
    p["l2_w2"] = conv_w(ks[3], op2, out_planes)
    p["l3_w1"] = conv_w(ks[4], in_planes, op2)
    p["l3_bn1"] = bn(ks[5], op2)
    p["l3_w2"] = conv_w(ks[6], op2, op2)
    p["l3_bn2"] = bn(ks[7], op2)
    p["l3_w3"] = conv_w(ks[8], op2, out_planes)
    p["fin_bn"] = bn(ks[9], out_planes)
    return p


def _make_band_stacked(w_bf16, W):
    """HWIO (K,K,Cin,Cout) bf16 -> (K*W*Cin, W*Cout) stacked block-banded bf16 matrix."""
    K, _, Cin, Cout = w_bf16.shape
    p = K // 2
    wf = w_bf16.astype(jnp.float32)
    blocks = []
    for ky in range(K):
        m = jnp.zeros((W * Cin, W * Cout), jnp.float32)
        for kx in range(K):
            dx = kx - p
            # block-banded: out col block wo uses input col block wi = wo + dx
            m = m + jnp.kron(jnp.eye(W, W, -dx, dtype=jnp.float32), wf[ky, kx])
        blocks.append(m)
    return jnp.concatenate(blocks, axis=0).astype(jnp.bfloat16)


def prepare_params(params, H, W, stride):
    """Fold BN into weights/bias, build stacked banded bf16 weights and pool selection mats."""
    f32 = jnp.float32
    cin = params["l1_w"].shape[2]
    if stride != 1:
        assert H % stride == 0 and W % stride == 0
        Wp = W // stride
    else:
        Wp = W

    fin_s, fin_b = params["fin_bn"]

    def fold(w, s):  # fold a per-output-channel scale into HWIO weights, cast to bf16
        return (w * s[None, None, None, :]).astype(jnp.bfloat16)

    # final-BN scale folded into the *last* conv of each branch (linear, no conv bias in ME)
    w1 = fold(params["l1_w"], fin_s)
    w22 = fold(params["l2_w2"], fin_s)
    w33 = fold(params["l3_w3"], fin_s)
    # intermediate BN scales folded into their preceding convs
    w21 = fold(params["l2_w1"], params["l2_bn1"][0])
    w31 = fold(params["l3_w1"], params["l3_bn1"][0])
    w32 = fold(params["l3_w2"], params["l3_bn2"][0])
    b21 = params["l2_bn1"][1].astype(f32)
    b31 = params["l3_bn1"][1].astype(f32)
    b32 = params["l3_bn2"][1].astype(f32)
    fb = fin_b.astype(f32)

    def brow(b):  # bias tiled along W so it broadcasts over the (rows, W*Cout) layout
        return jnp.tile(b, Wp).reshape(1, Wp * b.shape[0]).astype(f32)

    prep = {
        "l1_band": _make_band_stacked(w1, Wp),
        "l2_band1": _make_band_stacked(w21, Wp), "l2_b1": brow(b21),
        "l2_band2": _make_band_stacked(w22, Wp),
        "l3_band1": _make_band_stacked(w31, Wp), "l3_b1": brow(b31),
        "l3_band2": _make_band_stacked(w32, Wp), "l3_b2": brow(b32),
        "l3_band3": _make_band_stacked(w33, Wp),
        "fin_brow": brow(fb),
        # same folded bf16 weights, for the pure-JAX reference check
        "ref": {"w1": w1, "w21": w21, "b21": b21, "w22": w22,
                "w31": w31, "b31": b31, "w32": w32, "b32": b32,
                "w33": w33, "fin_b": fb},
    }
    if stride != 1:
        Ho, Wo = H // stride, W // stride
        prep["sel_h"] = (jnp.arange(H)[None, :] ==
                         (stride * jnp.arange(Ho))[:, None]).astype(jnp.bfloat16)
        S = (jnp.arange(W)[:, None] == (stride * jnp.arange(Wo))[None, :]).astype(f32)
        prep["sel_w"] = jnp.kron(S, jnp.eye(cin, dtype=f32)).astype(jnp.bfloat16)
    return prep


# ------------------------- pure-JAX reference (checks) ------------------------

def reference_forward(prep, x_nchw, stride):
    """Dense reference matching the fused kernel's bf16 rounding points."""
    f32 = jnp.float32
    rb = lambda a: a.astype(jnp.bfloat16).astype(f32)
    relu = lambda a: jnp.maximum(a, 0.0)
    r = prep["ref"]

    def conv(a, w):
        return lax.conv_general_dilated(
            a, w.astype(f32), (1, 1), "SAME",
            dimension_numbers=("NHWC", "HWIO", "NHWC"),
            precision=lax.Precision.HIGHEST)

    x = rb(jnp.transpose(x_nchw, (0, 2, 3, 1)))
    if stride != 1:
        x = lax.reduce_window(x, -jnp.inf, lax.max, (1, 3, 3, 1),
                              (1, stride, stride, 1),
                              ((0, 0), (1, 1), (1, 1), (0, 0)))
        x = rb(x)
    x1 = conv(x, r["w1"])                                   # kept in f32 (fused kernel does too)
    h = rb(relu(conv(x, r["w21"]) + r["b21"]))
    x2 = conv(h, r["w22"])
    h = rb(relu(conv(x, r["w31"]) + r["b31"]))
    h = rb(relu(conv(h, r["w32"]) + r["b32"]))
    x3 = conv(h, r["w33"])
    out = relu(x1 + x2 + x3 + r["fin_b"])
    return jnp.transpose(out, (0, 3, 1, 2))


# -------------------------------- main ----------------------------------------

if __name__ == "__main__":
    key = jax.random.PRNGKey(0)
    k_x, k_p = jax.random.split(key)

    in_planes, out_planes, kernel_size, stride = 4, 8, 3, 2
    B, H, W = 2, 16, 16

    x = jax.random.normal(k_x, (B, in_planes, H, W), jnp.float32)
    params = init_params(k_p, in_planes, out_planes, kernel_size)
    prep = prepare_params(params, H, W, stride)

    fwd = jax.jit(lambda p, xx: minkconv2d_forward(p, xx, stride))
    unc, out = fwd(prep, x)
    out = jax.block_until_ready(out)

    assert unc is None
    assert out.shape == (B, out_planes, H // stride, W // stride), out.shape
    assert bool(jnp.all(jnp.isfinite(out)))
    assert bool(jnp.all(out >= 0.0))  # final ReLU

    ref = reference_forward(prep, x, stride)
    err = float(jnp.max(jnp.abs(out - ref)))
    assert err < 5e-2, f"mismatch vs dense reference: max abs err {err}"
    print("KERNEL_OK")
</pallas_src>

<mosaic_0001>
module attributes {stable_mosaic.version = 11 : i64} {
  func.func @_fused_kernel(%arg0: i32, %arg1: memref<1x16x64xbf16, #tpu.memory_space<vmem>>, %arg2: memref<8x16xbf16, #tpu.memory_space<vmem>>, %arg3: memref<64x32xbf16, #tpu.memory_space<vmem>>, %arg4: memref<96x64xbf16, #tpu.memory_space<vmem>>, %arg5: memref<96x128xbf16, #tpu.memory_space<vmem>>, %arg6: memref<1x128xf32, #tpu.memory_space<vmem>>, %arg7: memref<384x64xbf16, #tpu.memory_space<vmem>>, %arg8: memref<96x128xbf16, #tpu.memory_space<vmem>>, %arg9: memref<1x128xf32, #tpu.memory_space<vmem>>, %arg10: memref<384x128xbf16, #tpu.memory_space<vmem>>, %arg11: memref<1x128xf32, #tpu.memory_space<vmem>>, %arg12: memref<384x64xbf16, #tpu.memory_space<vmem>>, %arg13: memref<1x64xf32, #tpu.memory_space<vmem>>, %arg14: memref<1x4x128xf32, #tpu.memory_space<vmem>>) attributes {dimension_semantics = [#tpu.dimension_semantics<parallel>], iteration_bounds = array<i64: 2>, scalar_prefetch = 0 : i64, scratch_operands = 0 : i64, tpu.core_type = #tpu.core_type<tc>, window_params = [{transform_indices = @transform_0, window_bounds = array<i64: 1, 16, 64>}, {pipeline_mode = #tpu.pipeline_mode<synchronous>, transform_indices = @transform_1, window_bounds = array<i64: 8, 16>}, {pipeline_mode = #tpu.pipeline_mode<synchronous>, transform_indices = @transform_2, window_bounds = array<i64: 64, 32>}, {pipeline_mode = #tpu.pipeline_mode<synchronous>, transform_indices = @transform_3, window_bounds = array<i64: 96, 64>}, {pipeline_mode = #tpu.pipeline_mode<synchronous>, transform_indices = @transform_4, window_bounds = array<i64: 96, 128>}, {pipeline_mode = #tpu.pipeline_mode<synchronous>, transform_indices = @transform_5, window_bounds = array<i64: 1, 128>}, {pipeline_mode = #tpu.pipeline_mode<synchronous>, transform_indices = @transform_6, window_bounds = array<i64: 384, 64>}, {pipeline_mode = #tpu.pipeline_mode<synchronous>, transform_indices = @transform_7, window_bounds = array<i64: 96, 128>}, {pipeline_mode = #tpu.pipeline_mode<synchronous>, transform_indices = @transform_8, window_bounds = array<i64: 1, 128>}, {pipeline_mode = #tpu.pipeline_mode<synchronous>, transform_indices = @transform_9, window_bounds = array<i64: 384, 128>}, {pipeline_mode = #tpu.pipeline_mode<synchronous>, transform_indices = @transform_10, window_bounds = array<i64: 1, 128>}, {pipeline_mode = #tpu.pipeline_mode<synchronous>, transform_indices = @transform_11, window_bounds = array<i64: 384, 64>}, {pipeline_mode = #tpu.pipeline_mode<synchronous>, transform_indices = @transform_12, window_bounds = array<i64: 1, 64>}, {transform_indices = @transform_13, window_bounds = array<i64: 1, 4, 128>}]} {
    %c0 = arith.constant 0 : index
    %c0_0 = arith.constant 0 : index
    %c0_1 = arith.constant 0 : index
    %0 = vector.load %arg1[%c0, %c0_0, %c0_1] : memref<1x16x64xbf16, #tpu.memory_space<vmem>>, vector<1x16x64xbf16>
    %1 = vector.shape_cast %0 : vector<1x16x64xbf16> to vector<16x64xbf16>
    %c0_2 = arith.constant 0 : index
    %c0_3 = arith.constant 0 : index
    %2 = vector.load %arg2[%c0_2, %c0_3] : memref<8x16xbf16, #tpu.memory_space<vmem>>, vector<8x16xbf16>
    %c0_4 = arith.constant 0 : index
    %c0_5 = arith.constant 0 : index
    %3 = vector.load %arg3[%c0_4, %c0_5] : memref<64x32xbf16, #tpu.memory_space<vmem>>, vector<64x32xbf16>
    %4 = vector.extract_strided_slice %1 {offsets = [0, 4], sizes = [16, 60], strides = [1, 1]} : vector<16x64xbf16> to vector<16x60xbf16>
    %cst = arith.constant 0xFF80 : bf16
    %5 = vector.broadcast %cst : bf16 to vector<16x4xbf16>
    %6 = tpu.concatenate %4, %5 in 1 : vector<16x60xbf16>, vector<16x4xbf16> -> vector<16x64xbf16>
    %7 = arith.maximumf %6, %1 : vector<16x64xbf16>
    %cst_6 = arith.constant 0xFF80 : bf16
    %8 = vector.broadcast %cst_6 : bf16 to vector<16x4xbf16>
    %9 = vector.extract_strided_slice %1 {offsets = [0, 0], sizes = [16, 60], strides = [1, 1]} : vector<16x64xbf16> to vector<16x60xbf16>
    %10 = tpu.concatenate %8, %9 in 1 : vector<16x4xbf16>, vector<16x60xbf16> -> vector<16x64xbf16>
    %11 = arith.maximumf %7, %10 : vector<16x64xbf16>
    %12 = vector.extract_strided_slice %11 {offsets = [1, 0], sizes = [15, 64], strides = [1, 1]} : vector<16x64xbf16> to vector<15x64xbf16>
    %cst_7 = arith.constant 0xFF80 : bf16
    %13 = vector.broadcast %cst_7 : bf16 to vector<1x64xbf16>
    %14 = tpu.concatenate %12, %13 in 0 : vector<15x64xbf16>, vector<1x64xbf16> -> vector<16x64xbf16>
    %15 = arith.maximumf %14, %11 : vector<16x64xbf16>
    %cst_8 = arith.constant 0xFF80 : bf16
    %16 = vector.broadcast %cst_8 : bf16 to vector<1x64xbf16>
    %17 = vector.extract_strided_slice %11 {offsets = [0, 0], sizes = [15, 64], strides = [1, 1]} : vector<16x64xbf16> to vector<15x64xbf16>
    %18 = tpu.concatenate %16, %17 in 0 : vector<1x64xbf16>, vector<15x64xbf16> -> vector<16x64xbf16>
    %19 = arith.maximumf %15, %18 : vector<16x64xbf16>
    %cst_9 = arith.constant dense<0.000000e+00> : vector<8x64xf32>
    %20 = tpu.matmul %2, %19, %cst_9 {dimension_numbers = #tpu.dot_dimension_numbers<[1], [0], [0], [1], [0, 0, 1, 1], [], []>} : vector<8x16xbf16>, vector<16x64xbf16>, vector<8x64xf32> -> vector<8x64xf32>
    %21 = arith.truncf %20 : vector<8x64xf32> to vector<8x64xbf16>
    %cst_10 = arith.constant dense<0.000000e+00> : vector<8x32xf32>
    %22 = tpu.matmul %21, %3, %cst_10 {dimension_numbers = #tpu.dot_dimension_numbers<[1], [0], [0], [1], [0, 0, 1, 1], [], []>} : vector<8x64xbf16>, vector<64x32xbf16>, vector<8x32xf32> -> vector<8x32xf32>
    %23 = arith.truncf %22 : vector<8x32xf32> to vector<8x32xbf16>
    %c0_11 = arith.constant 0 : index
    %c0_12 = arith.constant 0 : index
    %24 = vector.load %arg4[%c0_11, %c0_12] : memref<96x64xbf16, #tpu.memory_space<vmem>>, vector<96x64xbf16>
    %cst_13 = arith.constant 0.000000e+00 : bf16
    %25 = vector.broadcast %cst_13 : bf16 to vector<1x32xbf16>
    %26 = vector.extract_strided_slice %23 {offsets = [0, 0], sizes = [7, 32], strides = [1, 1]} : vector<8x32xbf16> to vector<7x32xbf16>
    %27 = tpu.concatenate %25, %26 in 0 : vector<1x32xbf16>, vector<7x32xbf16> -> vector<8x32xbf16>
    %28 = vector.extract_strided_slice %23 {offsets = [1, 0], sizes = [7, 32], strides = [1, 1]} : vector<8x32xbf16> to vector<7x32xbf16>
    %cst_14 = arith.constant 0.000000e+00 : bf16
    %29 = vector.broadcast %cst_14 : bf16 to vector<1x32xbf16>
    %30 = tpu.concatenate %28, %29 in 0 : vector<7x32xbf16>, vector<1x32xbf16> -> vector<8x32xbf16>
    %31 = tpu.concatenate %27, %23, %30 in 1 : vector<8x32xbf16>, vector<8x32xbf16>, vector<8x32xbf16> -> vector<8x96xbf16>
    %cst_15 = arith.constant dense<0.000000e+00> : vector<8x64xf32>
    %32 = tpu.matmul %31, %24, %cst_15 {dimension_numbers = #tpu.dot_dimension_numbers<[1], [0], [0], [1], [0, 0, 1, 1], [], []>} : vector<8x96xbf16>, vector<96x64xbf16>, vector<8x64xf32> -> vector<8x64xf32>
    %c0_16 = arith.constant 0 : index
    %c0_17 = arith.constant 0 : index
    %33 = vector.load %arg5[%c0_16, %c0_17] : memref<96x128xbf16, #tpu.memory_space<vmem>>, vector<96x128xbf16>
    %cst_18 = arith.constant 0.000000e+00 : bf16
    %34 = vector.broadcast %cst_18 : bf16 to vector<1x32xbf16>
    %35 = vector.extract_strided_slice %23 {offsets = [0, 0], sizes = [7, 32], strides = [1, 1]} : vector<8x32xbf16> to vector<7x32xbf16>
    %36 = tpu.concatenate %34, %35 in 0 : vector<1x32xbf16>, vector<7x32xbf16> -> vector<8x32xbf16>
    %37 = vector.extract_strided_slice %23 {offsets = [1, 0], sizes = [7, 32], strides = [1, 1]} : vector<8x32xbf16> to vector<7x32xbf16>
    %cst_19 = arith.constant 0.000000e+00 : bf16
    %38 = vector.broadcast %cst_19 : bf16 to vector<1x32xbf16>
    %39 = tpu.concatenate %37, %38 in 0 : vector<7x32xbf16>, vector<1x32xbf16> -> vector<8x32xbf16>
    %40 = tpu.concatenate %36, %23, %39 in 1 : vector<8x32xbf16>, vector<8x32xbf16>, vector<8x32xbf16> -> vector<8x96xbf16>
    %cst_20 = arith.constant dense<0.000000e+00> : vector<8x128xf32>
    %41 = tpu.matmul %40, %33, %cst_20 {dimension_numbers = #tpu.dot_dimension_numbers<[1], [0], [0], [1], [0, 0, 1, 1], [], []>} : vector<8x96xbf16>, vector<96x128xbf16>, vector<8x128xf32> -> vector<8x128xf32>
    %c0_21 = arith.constant 0 : index
    %c0_22 = arith.constant 0 : index
    %42 = vector.load %arg6[%c0_21, %c0_22] : memref<1x128xf32, #tpu.memory_space<vmem>>, vector<1x128xf32>
    %43 = vector.broadcast %42 : vector<1x128xf32> to vector<8x128xf32>
    %44 = arith.addf %41, %43 : vector<8x128xf32>
    %cst_23 = arith.constant 0.000000e+00 : f32
    %45 = vector.broadcast %cst_23 : f32 to vector<8x128xf32>
    %46 = arith.maximumf %44, %45 : vector<8x128xf32>
    %47 = arith.truncf %46 : vector<8x128xf32> to vector<8x128xbf16>
    %c0_24 = arith.constant 0 : index
    %c0_25 = arith.constant 0 : index
    %48 = vector.load %arg7[%c0_24, %c0_25] : memref<384x64xbf16, #tpu.memory_space<vmem>>, vector<384x64xbf16>
    %cst_26 = arith.constant 0.000000e+00 : bf16
    %49 = vector.broadcast %cst_26 : bf16 to vector<1x128xbf16>
    %50 = vector.extract_strided_slice %47 {offsets = [0, 0], sizes = [7, 128], strides = [1, 1]} : vector<8x128xbf16> to vector<7x128xbf16>
    %51 = tpu.concatenate %49, %50 in 0 : vector<1x128xbf16>, vector<7x128xbf16> -> vector<8x128xbf16>
    %52 = vector.extract_strided_slice %47 {offsets = [1, 0], sizes = [7, 128], strides = [1, 1]} : vector<8x128xbf16> to vector<7x128xbf16>
    %cst_27 = arith.constant 0.000000e+00 : bf16
    %53 = vector.broadcast %cst_27 : bf16 to vector<1x128xbf16>
    %54 = tpu.concatenate %52, %53 in 0 : vector<7x128xbf16>, vector<1x128xbf16> -> vector<8x128xbf16>
    %55 = tpu.concatenate %51, %47, %54 in 1 : vector<8x128xbf16>, vector<8x128xbf16>, vector<8x128xbf16> -> vector<8x384xbf16>
    %cst_28 = arith.constant dense<0.000000e+00> : vector<8x64xf32>
    %56 = tpu.matmul %55, %48, %cst_28 {dimension_numbers = #tpu.dot_dimension_numbers<[1], [0], [0], [1], [0, 0, 1, 1], [], []>} : vector<8x384xbf16>, vector<384x64xbf16>, vector<8x64xf32> -> vector<8x64xf32>
    %c0_29 = arith.constant 0 : index
    %c0_30 = arith.constant 0 : index
    %57 = vector.load %arg8[%c0_29, %c0_30] : memref<96x128xbf16, #tpu.memory_space<vmem>>, vector<96x128xbf16>
    %cst_31 = arith.constant 0.000000e+00 : bf16
    %58 = vector.broadcast %cst_31 : bf16 to vector<1x32xbf16>
    %59 = vector.extract_strided_slice %23 {offsets = [0, 0], sizes = [7, 32], strides = [1, 1]} : vector<8x32xbf16> to vector<7x32xbf16>
    %60 = tpu.concatenate %58, %59 in 0 : vector<1x32xbf16>, vector<7x32xbf16> -> vector<8x32xbf16>
    %61 = vector.extract_strided_slice %23 {offsets = [1, 0], sizes = [7, 32], strides = [1, 1]} : vector<8x32xbf16> to vector<7x32xbf16>
    %cst_32 = arith.constant 0.000000e+00 : bf16
    %62 = vector.broadcast %cst_32 : bf16 to vector<1x32xbf16>
    %63 = tpu.concatenate %61, %62 in 0 : vector<7x32xbf16>, vector<1x32xbf16> -> vector<8x32xbf16>
    %64 = tpu.concatenate %60, %23, %63 in 1 : vector<8x32xbf16>, vector<8x32xbf16>, vector<8x32xbf16> -> vector<8x96xbf16>
    %cst_33 = arith.constant dense<0.000000e+00> : vector<8x128xf32>
    %65 = tpu.matmul %64, %57, %cst_33 {dimension_numbers = #tpu.dot_dimension_numbers<[1], [0], [0], [1], [0, 0, 1, 1], [], []>} : vector<8x96xbf16>, vector<96x128xbf16>, vector<8x128xf32> -> vector<8x128xf32>
    %c0_34 = arith.constant 0 : index
    %c0_35 = arith.constant 0 : index
    %66 = vector.load %arg9[%c0_34, %c0_35] : memref<1x128xf32, #tpu.memory_space<vmem>>, vector<1x128xf32>
    %67 = vector.broadcast %66 : vector<1x128xf32> to vector<8x128xf32>
    %68 = arith.addf %65, %67 : vector<8x128xf32>
    %cst_36 = arith.constant 0.000000e+00 : f32
    %69 = vector.broadcast %cst_36 : f32 to vector<8x128xf32>
    %70 = arith.maximumf %68, %69 : vector<8x128xf32>
    %71 = arith.truncf %70 : vector<8x128xf32> to vector<8x128xbf16>
    %c0_37 = arith.constant 0 : index
    %c0_38 = arith.constant 0 : index
    %72 = vector.load %arg10[%c0_37, %c0_38] : memref<384x128xbf16, #tpu.memory_space<vmem>>, vector<384x128xbf16>
    %cst_39 = arith.constant 0.000000e+00 : bf16
    %73 = vector.broadcast %cst_39 : bf16 to vector<1x128xbf16>
    %74 = vector.extract_strided_slice %71 {offsets = [0, 0], sizes = [7, 128], strides = [1, 1]} : vector<8x128xbf16> to vector<7x128xbf16>
    %75 = tpu.concatenate %73, %74 in 0 : vector<1x128xbf16>, vector<7x128xbf16> -> vector<8x128xbf16>
    %76 = vector.extract_strided_slice %71 {offsets = [1, 0], sizes = [7, 128], strides = [1, 1]} : vector<8x128xbf16> to vector<7x128xbf16>
    %cst_40 = arith.constant 0.000000e+00 : bf16
    %77 = vector.broadcast %cst_40 : bf16 to vector<1x128xbf16>
    %78 = tpu.concatenate %76, %77 in 0 : vector<7x128xbf16>, vector<1x128xbf16> -> vector<8x128xbf16>
    %79 = tpu.concatenate %75, %71, %78 in 1 : vector<8x128xbf16>, vector<8x128xbf16>, vector<8x128xbf16> -> vector<8x384xbf16>
    %cst_41 = arith.constant dense<0.000000e+00> : vector<8x128xf32>
    %80 = tpu.matmul %79, %72, %cst_41 {dimension_numbers = #tpu.dot_dimension_numbers<[1], [0], [0], [1], [0, 0, 1, 1], [], []>} : vector<8x384xbf16>, vector<384x128xbf16>, vector<8x128xf32> -> vector<8x128xf32>
    %c0_42 = arith.constant 0 : index
    %c0_43 = arith.constant 0 : index
    %81 = vector.load %arg11[%c0_42, %c0_43] : memref<1x128xf32, #tpu.memory_space<vmem>>, vector<1x128xf32>
    %82 = vector.broadcast %81 : vector<1x128xf32> to vector<8x128xf32>
    %83 = arith.addf %80, %82 : vector<8x128xf32>
    %cst_44 = arith.constant 0.000000e+00 : f32
    %84 = vector.broadcast %cst_44 : f32 to vector<8x128xf32>
    %85 = arith.maximumf %83, %84 : vector<8x128xf32>
    %86 = arith.truncf %85 : vector<8x128xf32> to vector<8x128xbf16>
    %c0_45 = arith.constant 0 : index
    %c0_46 = arith.constant 0 : index
    %87 = vector.load %arg12[%c0_45, %c0_46] : memref<384x64xbf16, #tpu.memory_space<vmem>>, vector<384x64xbf16>
    %cst_47 = arith.constant 0.000000e+00 : bf16
    %88 = vector.broadcast %cst_47 : bf16 to vector<1x128xbf16>
    %89 = vector.extract_strided_slice %86 {offsets = [0, 0], sizes = [7, 128], strides = [1, 1]} : vector<8x128xbf16> to vector<7x128xbf16>
    %90 = tpu.concatenate %88, %89 in 0 : vector<1x128xbf16>, vector<7x128xbf16> -> vector<8x128xbf16>
    %91 = vector.extract_strided_slice %86 {offsets = [1, 0], sizes = [7, 128], strides = [1, 1]} : vector<8x128xbf16> to vector<7x128xbf16>
    %cst_48 = arith.constant 0.000000e+00 : bf16
    %92 = vector.broadcast %cst_48 : bf16 to vector<1x128xbf16>
    %93 = tpu.concatenate %91, %92 in 0 : vector<7x128xbf16>, vector<1x128xbf16> -> vector<8x128xbf16>
    %94 = tpu.concatenate %90, %86, %93 in 1 : vector<8x128xbf16>, vector<8x128xbf16>, vector<8x128xbf16> -> vector<8x384xbf16>
    %cst_49 = arith.constant dense<0.000000e+00> : vector<8x64xf32>
    %95 = tpu.matmul %94, %87, %cst_49 {dimension_numbers = #tpu.dot_dimension_numbers<[1], [0], [0], [1], [0, 0, 1, 1], [], []>} : vector<8x384xbf16>, vector<384x64xbf16>, vector<8x64xf32> -> vector<8x64xf32>
    %96 = arith.addf %32, %56 : vector<8x64xf32>
    %97 = arith.addf %96, %95 : vector<8x64xf32>
    %c0_50 = arith.constant 0 : index
    %c0_51 = arith.constant 0 : index
    %98 = vector.load %arg13[%c0_50, %c0_51] : memref<1x64xf32, #tpu.memory_space<vmem>>, vector<1x64xf32>
    %99 = vector.broadcast %98 : vector<1x64xf32> to vector<8x64xf32>
    %100 = arith.addf %97, %99 : vector<8x64xf32>
    %cst_52 = arith.constant 0.000000e+00 : f32
    %101 = vector.broadcast %cst_52 : f32 to vector<8x64xf32>
    %102 = arith.maximumf %100, %101 : vector<8x64xf32>
    %103 = vector.extract_strided_slice %102 {offsets = [0, 0], sizes = [4, 64], strides = [1, 1]} : vector<8x64xf32> to vector<4x64xf32>
    %104 = vector.extract_strided_slice %102 {offsets = [4, 0], sizes = [4, 64], strides = [1, 1]} : vector<8x64xf32> to vector<4x64xf32>
    %105 = tpu.concatenate %103, %104 in 1 : vector<4x64xf32>, vector<4x64xf32> -> vector<4x128xf32>
    %c0_53 = arith.constant 0 : index
    %c0_54 = arith.constant 0 : index
    %c0_55 = arith.constant 0 : index
    %106 = vector.load %arg14[%c0_53, %c0_54, %c0_55] : memref<1x4x128xf32, #tpu.memory_space<vmem>>, vector<1x4x128xf32>
    %107 = vector.shape_cast %106 : vector<1x4x128xf32> to vector<4x128xf32>
    %108 = vector.shape_cast %105 : vector<4x128xf32> to vector<1x4x128xf32>
    tpu.vector_store %arg14[%c0_53, %c0_54, %c0_55], %108 {strides = array<i32>} : memref<1x4x128xf32, #tpu.memory_space<vmem>>, vector<1x4x128xf32>,
    return
  }
  func.func @transform_0(%arg0: i32) -> (i32, i32, i32) {
    %c0_i32 = arith.constant 0 : i32
    %c0_i32_0 = arith.constant 0 : i32
    %c0_i32_1 = arith.constant 0 : i32
    return %arg0, %c0_i32, %c0_i32_0 : i32, i32, i32
  }
  func.func @transform_1(%arg0: i32) -> (i32, i32) {
    %c0_i32 = arith.constant 0 : i32
    %c0_i32_0 = arith.constant 0 : i32
    %c0_i32_1 = arith.constant 0 : i32
    return %c0_i32, %c0_i32_0 : i32, i32
  }
  func.func @transform_2(%arg0: i32) -> (i32, i32) {
    %c0_i32 = arith.constant 0 : i32
    %c0_i32_0 = arith.constant 0 : i32
    %c0_i32_1 = arith.constant 0 : i32
    return %c0_i32, %c0_i32_0 : i32, i32
  }
  func.func @transform_3(%arg0: i32) -> (i32, i32) {
    %c0_i32 = arith.constant 0 : i32
    %c0_i32_0 = arith.constant 0 : i32
    %c0_i32_1 = arith.constant 0 : i32
    return %c0_i32, %c0_i32_0 : i32, i32
  }
  func.func @transform_4(%arg0: i32) -> (i32, i32) {
    %c0_i32 = arith.constant 0 : i32
    %c0_i32_0 = arith.constant 0 : i32
    %c0_i32_1 = arith.constant 0 : i32
    return %c0_i32, %c0_i32_0 : i32, i32
  }
  func.func @transform_5(%arg0: i32) -> (i32, i32) {
    %c0_i32 = arith.constant 0 : i32
    %c0_i32_0 = arith.constant 0 : i32
    %c0_i32_1 = arith.constant 0 : i32
    return %c0_i32, %c0_i32_0 : i32, i32
  }
  func.func @transform_6(%arg0: i32) -> (i32, i32) {
    %c0_i32 = arith.constant 0 : i32
    %c0_i32_0 = arith.constant 0 : i32
    %c0_i32_1 = arith.constant 0 : i32
    return %c0_i32, %c0_i32_0 : i32, i32
  }
  func.func @transform_7(%arg0: i32) -> (i32, i32) {
    %c0_i32 = arith.constant 0 : i32
    %c0_i32_0 = arith.constant 0 : i32
    %c0_i32_1 = arith.constant 0 : i32
    return %c0_i32, %c0_i32_0 : i32, i32
  }
  func.func @transform_8(%arg0: i32) -> (i32, i32) {
    %c0_i32 = arith.constant 0 : i32
    %c0_i32_0 = arith.constant 0 : i32
    %c0_i32_1 = arith.constant 0 : i32
    return %c0_i32, %c0_i32_0 : i32, i32
  }
  func.func @transform_9(%arg0: i32) -> (i32, i32) {
    %c0_i32 = arith.constant 0 : i32
    %c0_i32_0 = arith.constant 0 : i32
    %c0_i32_1 = arith.constant 0 : i32
    return %c0_i32, %c0_i32_0 : i32, i32
  }
  func.func @transform_10(%arg0: i32) -> (i32, i32) {
    %c0_i32 = arith.constant 0 : i32
    %c0_i32_0 = arith.constant 0 : i32
    %c0_i32_1 = arith.constant 0 : i32
    return %c0_i32, %c0_i32_0 : i32, i32
  }
  func.func @transform_11(%arg0: i32) -> (i32, i32) {
    %c0_i32 = arith.constant 0 : i32
    %c0_i32_0 = arith.constant 0 : i32
    %c0_i32_1 = arith.constant 0 : i32
    return %c0_i32, %c0_i32_0 : i32, i32
  }
  func.func @transform_12(%arg0: i32) -> (i32, i32) {
    %c0_i32 = arith.constant 0 : i32
    %c0_i32_0 = arith.constant 0 : i32
    %c0_i32_1 = arith.constant 0 : i32
    return %c0_i32, %c0_i32_0 : i32, i32
  }
  func.func @transform_13(%arg0: i32) -> (i32, i32, i32) {
    %c0_i32 = arith.constant 0 : i32
    %c0_i32_0 = arith.constant 0 : i32
    %c0_i32_1 = arith.constant 0 : i32
    return %arg0, %c0_i32, %c0_i32_0 : i32, i32, i32
  }
}

</mosaic_0001>

<llo_original>
// kernel: _lambda_.1
$region0: #{_lambda_.1}
  #allocation0 [shape = 'u32[]', space=smem, size = 0x4, offset = 0x4, fixed_abs, tag = 'smem constant byte address 0x4 - core index']
  #allocation1 [shape = 'u32[144,128]{1,0:T(1,128)}', space=vmem, size = 0x12000, scoped, tag = 'internal scratch']
  %s0 = inlined_call_operand.vmem [shape: bf16[2,16,64], index: 0, kind: input, shape index: {}]
  %s1 = inlined_call_operand.vmem [shape: bf16[8,16], index: 1, kind: input, shape index: {}]
  %s2 = inlined_call_operand.vmem [shape: bf16[64,32], index: 2, kind: input, shape index: {}]
  %s3 = inlined_call_operand.vmem [shape: bf16[96,64], index: 3, kind: input, shape index: {}]
  %s4 = inlined_call_operand.vmem [shape: bf16[96,128], index: 4, kind: input, shape index: {}]
  %s5 = inlined_call_operand.vmem [shape: f32[1,128], index: 5, kind: input, shape index: {}]
  %s6 = inlined_call_operand.vmem [shape: bf16[384,64], index: 6, kind: input, shape index: {}]
  %s7 = inlined_call_operand.vmem [shape: bf16[96,128], index: 7, kind: input, shape index: {}]
  %s8 = inlined_call_operand.vmem [shape: f32[1,128], index: 8, kind: input, shape index: {}]
  %s9 = inlined_call_operand.vmem [shape: bf16[384,128], index: 9, kind: input, shape index: {}]
  %s10 = inlined_call_operand.vmem [shape: f32[1,128], index: 10, kind: input, shape index: {}]
  %s11 = inlined_call_operand.vmem [shape: bf16[384,64], index: 11, kind: input, shape index: {}]
  %s12 = inlined_call_operand.vmem [shape: f32[1,64], index: 12, kind: input, shape index: {}]
  %s13 = inlined_call_operand.vmem [shape: f32[2,4,128], index: 13, kind: output, shape index: {}]
  %s14 = sld [smem:[#allocation0]]
  $region85: #{_lambda_.1} parent=0
    _
  %s16 = ssub.s32 1, %s14
  %s17 = scalar_select 0, %s16, %s14
  loop: start=0, step=1, limit=4
  $region2: #{_lambda_.1} parent=0 // loop_pre_header
    _
  $region3: #{_lambda_.1} parent=0 // loop_header
    %s19 = sphi 0, %s23
    %p20 = scmp.ge.s32.totalorder %s19, 4
    %s29 = sphi 0, %s31
    %s32 = sphi 0, %s29
    %s33 = sphi 0, %s32
    %s49 = sphi 0, %s33
    %s53 = sphi 0, %s53
    %s55 = sphi 0, %s53
    %s56 = sphi 0, %s55
    %s70 = sphi 0, %s56
    %s74 = sphi 0, %s74
    %s76 = sphi 0, %s74
    %s77 = sphi 0, %s76
    %s91 = sphi 0, %s77
    %s95 = sphi 0, %s95
    %s97 = sphi 0, %s95
    %s98 = sphi 0, %s97
    %s112 = sphi 0, %s98
    %s116 = sphi 0, %s116
    %s118 = sphi 0, %s116
    %s119 = sphi 0, %s118
    %s133 = sphi 0, %s119
    %s137 = sphi 0, %s137
    %s139 = sphi 0, %s137
    %s140 = sphi 0, %s139
    %s154 = sphi 0, %s140
    %s158 = sphi 0, %s158
    %s160 = sphi 0, %s158
    %s161 = sphi 0, %s160
    %s175 = sphi 0, %s161
    %s179 = sphi 0, %s179
    %s181 = sphi 0, %s179
    %s182 = sphi 0, %s181
    %s196 = sphi 0, %s182
    %s200 = sphi 0, %s200
    %s202 = sphi 0, %s200
    %s203 = sphi 0, %s202
    %s217 = sphi 0, %s203
    %s221 = sphi 0, %s221
    %s223 = sphi 0, %s221
    %s224 = sphi 0, %s223
    %s238 = sphi 0, %s224
    %s242 = sphi 0, %s242
    %s244 = sphi 0, %s242
    %s245 = sphi 0, %s244
    %s259 = sphi 0, %s245
    %s263 = sphi 0, %s263
    %s265 = sphi 0, %s263
    %s266 = sphi 0, %s265
    %s280 = sphi 0, %s266
    %s284 = sphi 0, %s284
    %s286 = sphi 0, %s284
    %s287 = sphi 0, %s286
    %s301 = sphi 0, %s287
    %s307 = sphi 0, %s309
    %s310 = sphi 0, %s307
    %s311 = sphi 0, %s310
    %s327 = sphi 0, %s311
  $region4: #{_lambda_.1} parent=0 // loop_header_branch
    %22 = sbr.rel (%p20) target = $region8
  $region5: #{_lambda_.1} parent=0 // loop_body
    %s24 = ssub.s32 %s19, 1
    %s25 = ssub.s32 %s19, 2
    %s26 = sadd.s32 %s19, 1
    %s27 = ssub.s32 %s19, %s26
    %p28 = scmp.eq.s32.totalorder %s27, 0
    %s30 = sadd.s32 %s29, 1
    %s31 = scalar_select %p28, %s29, %s30
    %p34 = pneg %p28
    %p35 = scmp.eq.s32.totalorder %s19, 1
    %p36 = por %p34, %p35
    %p37 = scmp.ne.s32.totalorder %s29, %s32
    %p38 = scmp.eq.s32.totalorder %s19, 0
    %p39 = por %p37, %p38
    %p40 = scmp.ne.s32.totalorder %s29, %s32
    %p41 = scmp.eq.s32.totalorder %s24, 1
    %p42 = por %p40, %p41
    %p43 = scmp.ne.s32.totalorder %s32, %s33
    %p44 = scmp.eq.s32.totalorder %s24, 0
    %p45 = por %p43, %p44
    %p46 = scmp.ne.s32.totalorder %s32, %s33
    %p47 = scmp.eq.s32.totalorder %s25, 1
    %p48 = por %p46, %p47
    %p50 = scmp.ne.s32.totalorder %s33, %s49
    %p51 = scmp.eq.s32.totalorder %s25, 0
    %p52 = por %p50, %p51
    %s54 = sadd.s32 %s53, 1
    %p57 = scmp.eq.s32.totalorder %s19, 1
    %p58 = scmp.ne.s32.totalorder %s53, %s55
    %p59 = scmp.eq.s32.totalorder %s19, 0
    %p60 = por %p58, %p59
    %p61 = scmp.ne.s32.totalorder %s53, %s55
    %p62 = scmp.eq.s32.totalorder %s24, 1
    %p63 = por %p61, %p62
    %p64 = scmp.ne.s32.totalorder %s55, %s56
    %p65 = scmp.eq.s32.totalorder %s24, 0
    %p66 = por %p64, %p65
    %p67 = scmp.ne.s32.totalorder %s55, %s56
    %p68 = scmp.eq.s32.totalorder %s25, 1
    %p69 = por %p67, %p68
    %p71 = scmp.ne.s32.totalorder %s56, %s70
    %p72 = scmp.eq.s32.totalorder %s25, 0
    %p73 = por %p71, %p72
    %s75 = sadd.s32 %s74, 1
    %p78 = scmp.eq.s32.totalorder %s19, 1
    %p79 = scmp.ne.s32.totalorder %s74, %s76
    %p80 = scmp.eq.s32.totalorder %s19, 0
    %p81 = por %p79, %p80
    %p82 = scmp.ne.s32.totalorder %s74, %s76
    %p83 = scmp.eq.s32.totalorder %s24, 1
    %p84 = por %p82, %p83
    %p85 = scmp.ne.s32.totalorder %s76, %s77
    %p86 = scmp.eq.s32.totalorder %s24, 0
    %p87 = por %p85, %p86
    %p88 = scmp.ne.s32.totalorder %s76, %s77
    %p89 = scmp.eq.s32.totalorder %s25, 1
    %p90 = por %p88, %p89
    %p92 = scmp.ne.s32.totalorder %s77, %s91
    %p93 = scmp.eq.s32.totalorder %s25, 0
    %p94 = por %p92, %p93
    %s96 = sadd.s32 %s95, 1
    %p99 = scmp.eq.s32.totalorder %s19, 1
    %p100 = scmp.ne.s32.totalorder %s95, %s97
    %p101 = scmp.eq.s32.totalorder %s19, 0
    %p102 = por %p100, %p101
    %p103 = scmp.ne.s32.totalorder %s95, %s97
    %p104 = scmp.eq.s32.totalorder %s24, 1
    %p105 = por %p103, %p104
    %p106 = scmp.ne.s32.totalorder %s97, %s98
    %p107 = scmp.eq.s32.totalorder %s24, 0
    %p108 = por %p106, %p107
    %p109 = scmp.ne.s32.totalorder %s97, %s98
    %p110 = scmp.eq.s32.totalorder %s25, 1
    %p111 = por %p109, %p110
    %p113 = scmp.ne.s32.totalorder %s98, %s112
    %p114 = scmp.eq.s32.totalorder %s25, 0
    %p115 = por %p113, %p114
    %s117 = sadd.s32 %s116, 1
    %p120 = scmp.eq.s32.totalorder %s19, 1
    %p121 = scmp.ne.s32.totalorder %s116, %s118
    %p122 = scmp.eq.s32.totalorder %s19, 0
    %p123 = por %p121, %p122
    %p124 = scmp.ne.s32.totalorder %s116, %s118
    %p125 = scmp.eq.s32.totalorder %s24, 1
    %p126 = por %p124, %p125
    %p127 = scmp.ne.s32.totalorder %s118, %s119
    %p128 = scmp.eq.s32.totalorder %s24, 0
    %p129 = por %p127, %p128
    %p130 = scmp.ne.s32.totalorder %s118, %s119
    %p131 = scmp.eq.s32.totalorder %s25, 1
    %p132 = por %p130, %p131
    %p134 = scmp.ne.s32.totalorder %s119, %s133
    %p135 = scmp.eq.s32.totalorder %s25, 0
    %p136 = por %p134, %p135
    %s138 = sadd.s32 %s137, 1
    %p141 = scmp.eq.s32.totalorder %s19, 1
    %p142 = scmp.ne.s32.totalorder %s137, %s139
    %p143 = scmp.eq.s32.totalorder %s19, 0
    %p144 = por %p142, %p143
    %p145 = scmp.ne.s32.totalorder %s137, %s139
    %p146 = scmp.eq.s32.totalorder %s24, 1
    %p147 = por %p145, %p146
    %p148 = scmp.ne.s32.totalorder %s139, %s140
    %p149 = scmp.eq.s32.totalorder %s24, 0
    %p150 = por %p148, %p149
    %p151 = scmp.ne.s32.totalorder %s139, %s140
    %p152 = scmp.eq.s32.totalorder %s25, 1
    %p153 = por %p151, %p152
    %p155 = scmp.ne.s32.totalorder %s140, %s154
    %p156 = scmp.eq.s32.totalorder %s25, 0
    %p157 = por %p155, %p156
    %s159 = sadd.s32 %s158, 1
    %p162 = scmp.eq.s32.totalorder %s19, 1
    %p163 = scmp.ne.s32.totalorder %s158, %s160
    %p164 = scmp.eq.s32.totalorder %s19, 0
    %p165 = por %p163, %p164
    %p166 = scmp.ne.s32.totalorder %s158, %s160
    %p167 = scmp.eq.s32.totalorder %s24, 1
    %p168 = por %p166, %p167
    %p169 = scmp.ne.s32.totalorder %s160, %s161
    %p170 = scmp.eq.s32.totalorder %s24, 0
    %p171 = por %p169, %p170
    %p172 = scmp.ne.s32.totalorder %s160, %s161
    %p173 = scmp.eq.s32.totalorder %s25, 1
    %p174 = por %p172, %p173
    %p176 = scmp.ne.s32.totalorder %s161, %s175
    %p177 = scmp.eq.s32.totalorder %s25, 0
    %p178 = por %p176, %p177
    %s180 = sadd.s32 %s179, 1
    %p183 = scmp.eq.s32.totalorder %s19, 1
    %p184 = scmp.ne.s32.totalorder %s179, %s181
    %p185 = scmp.eq.s32.totalorder %s19, 0
    %p186 = por %p184, %p185
    %p187 = scmp.ne.s32.totalorder %s179, %s181
    %p188 = scmp.eq.s32.totalorder %s24, 1
    %p189 = por %p187, %p188
    %p190 = scmp.ne.s32.totalorder %s181, %s182
    %p191 = scmp.eq.s32.totalorder %s24, 0
    %p192 = por %p190, %p191
    %p193 = scmp.ne.s32.totalorder %s181, %s182
    %p194 = scmp.eq.s32.totalorder %s25, 1
    %p195 = por %p193, %p194
    %p197 = scmp.ne.s32.totalorder %s182, %s196
    %p198 = scmp.eq.s32.totalorder %s25, 0
    %p199 = por %p197, %p198
    %s201 = sadd.s32 %s200, 1
    %p204 = scmp.eq.s32.totalorder %s19, 1
    %p205 = scmp.ne.s32.totalorder %s200, %s202
    %p206 = scmp.eq.s32.totalorder %s19, 0
    %p207 = por %p205, %p206
    %p208 = scmp.ne.s32.totalorder %s200, %s202
    %p209 = scmp.eq.s32.totalorder %s24, 1
    %p210 = por %p208, %p209
    %p211 = scmp.ne.s32.totalorder %s202, %s203
    %p212 = scmp.eq.s32.totalorder %s24, 0
    %p213 = por %p211, %p212
    %p214 = scmp.ne.s32.totalorder %s202, %s203
    %p215 = scmp.eq.s32.totalorder %s25, 1
    %p216 = por %p214, %p215
    %p218 = scmp.ne.s32.totalorder %s203, %s217
    %p219 = scmp.eq.s32.totalorder %s25, 0
    %p220 = por %p218, %p219
    %s222 = sadd.s32 %s221, 1
    %p225 = scmp.eq.s32.totalorder %s19, 1
    %p226 = scmp.ne.s32.totalorder %s221, %s223
    %p227 = scmp.eq.s32.totalorder %s19, 0
    %p228 = por %p226, %p227
    %p229 = scmp.ne.s32.totalorder %s221, %s223
    %p230 = scmp.eq.s32.totalorder %s24, 1
    %p231 = por %p229, %p230
    %p232 = scmp.ne.s32.totalorder %s223, %s224
    %p233 = scmp.eq.s32.totalorder %s24, 0
    %p234 = por %p232, %p233
    %p235 = scmp.ne.s32.totalorder %s223, %s224
    %p236 = scmp.eq.s32.totalorder %s25, 1
    %p237 = por %p235, %p236
    %p239 = scmp.ne.s32.totalorder %s224, %s238
    %p240 = scmp.eq.s32.totalorder %s25, 0
    %p241 = por %p239, %p240
    %s243 = sadd.s32 %s242, 1
    %p246 = scmp.eq.s32.totalorder %s19, 1
    %p247 = scmp.ne.s32.totalorder %s242, %s244
    %p248 = scmp.eq.s32.totalorder %s19, 0
    %p249 = por %p247, %p248
    %p250 = scmp.ne.s32.totalorder %s242, %s244
    %p251 = scmp.eq.s32.totalorder %s24, 1
    %p252 = por %p250, %p251
    %p253 = scmp.ne.s32.totalorder %s244, %s245
    %p254 = scmp.eq.s32.totalorder %s24, 0
    %p255 = por %p253, %p254
    %p256 = scmp.ne.s32.totalorder %s244, %s245
    %p257 = scmp.eq.s32.totalorder %s25, 1
    %p258 = por %p256, %p257
    %p260 = scmp.ne.s32.totalorder %s245, %s259
    %p261 = scmp.eq.s32.totalorder %s25, 0
    %p262 = por %p260, %p261
    %s264 = sadd.s32 %s263, 1
    %p267 = scmp.eq.s32.totalorder %s19, 1
    %p268 = scmp.ne.s32.totalorder %s263, %s265
    %p269 = scmp.eq.s32.totalorder %s19, 0
    %p270 = por %p268, %p269
    %p271 = scmp.ne.s32.totalorder %s263, %s265
    %p272 = scmp.eq.s32.totalorder %s24, 1
    %p273 = por %p271, %p272
    %p274 = scmp.ne.s32.totalorder %s265, %s266
    %p275 = scmp.eq.s32.totalorder %s24, 0
    %p276 = por %p274, %p275
    %p277 = scmp.ne.s32.totalorder %s265, %s266
    %p278 = scmp.eq.s32.totalorder %s25, 1
    %p279 = por %p277, %p278
    %p281 = scmp.ne.s32.totalorder %s266, %s280
    %p282 = scmp.eq.s32.totalorder %s25, 0
    %p283 = por %p281, %p282
    %s285 = sadd.s32 %s284, 1
    %p288 = scmp.eq.s32.totalorder %s19, 1
    %p289 = scmp.ne.s32.totalorder %s284, %s286
    %p290 = scmp.eq.s32.totalorder %s19, 0
    %p291 = por %p289, %p290
    %p292 = scmp.ne.s32.totalorder %s284, %s286
    %p293 = scmp.eq.s32.totalorder %s24, 1
    %p294 = por %p292, %p293
    %p295 = scmp.ne.s32.totalorder %s286, %s287
    %p296 = scmp.eq.s32.totalorder %s24, 0
    %p297 = por %p295, %p296
    %p298 = scmp.ne.s32.totalorder %s286, %s287
    %p299 = scmp.eq.s32.totalorder %s25, 1
    %p300 = por %p298, %p299
    %p302 = scmp.ne.s32.totalorder %s287, %s301
    %p303 = scmp.eq.s32.totalorder %s25, 0
    %p304 = por %p302, %p303
    %s305 = ssub.s32 %s19, %s26
    %p306 = scmp.eq.s32.totalorder %s305, 0
    %s308 = sadd.s32 %s307, 1
    %s309 = scalar_select %p306, %s307, %s308
    %p312 = pneg %p306
    %p313 = scmp.eq.s32.totalorder %s19, 1
    %p314 = por %p312, %p313
    %p315 = scmp.ne.s32.totalorder %s307, %s310
    %p316 = scmp.eq.s32.totalorder %s19, 0
    %p317 = por %p315, %p316
    %p318 = scmp.ne.s32.totalorder %s307, %s310
    %p319 = scmp.eq.s32.totalorder %s24, 1
    %p320 = por %p318, %p319
    %p321 = scmp.ne.s32.totalorder %s310, %s311
    %p322 = scmp.eq.s32.totalorder %s24, 0
    %p323 = por %p321, %p322
    %p324 = scmp.ne.s32.totalorder %s310, %s311
    %p325 = scmp.eq.s32.totalorder %s25, 1
    %p326 = por %p324, %p325
    %p328 = scmp.ne.s32.totalorder %s311, %s327
    %p329 = scmp.eq.s32.totalorder %s25, 0
    %p330 = por %p328, %p329
    %p331 = scmp.le.s32.totalorder 1, %s19
    %p332 = scmp.lt.s32.totalorder %s19, 3
    %p333 = pnand %p331, %p332
    %p334 = pneg %p333
    // Predicated region
    $region9: #{_lambda_.1} parent=5 // pred_check
      _
    $region10: #{_lambda_.1} parent=5 // pred_check_branch
      %336 = sbr.rel (%p333) target = $region12
    $region11: #{_lambda_.1} parent=5 // pred_region
      %s337 = ssub.s32 %s19, 1
      // Predicated region
      $region13: #{_lambda_.1} parent=11 // pred_check
        %p338 = pneg %p66
      $region14: #{_lambda_.1} parent=11 // pred_check_branch
        %340 = sbr.rel (%p338) target = $region16
      $region15: #{_lambda_.1} parent=11 // pred_region
        _
      $region16: #{_lambda_.1} parent=11 // pred_fallthru
        _
      // Predicated region
      $region17: #{_lambda_.1} parent=11 // pred_check
        %p341 = pneg %p87
      $region18: #{_lambda_.1} parent=11 // pred_check_branch
        %343 = sbr.rel (%p341) target = $region20
      $region19: #{_lambda_.1} parent=11 // pred_region
        _
      $region20: #{_lambda_.1} parent=11 // pred_fallthru
        _
      // Predicated region
      $region21: #{_lambda_.1} parent=11 // pred_check
        %p344 = pneg %p108
      $region22: #{_lambda_.1} parent=11 // pred_check_branch
        %346 = sbr.rel (%p344) target = $region24
      $region23: #{_lambda_.1} parent=11 // pred_region
        _
      $region24: #{_lambda_.1} parent=11 // pred_fallthru
        _
      // Predicated region
      $region25: #{_lambda_.1} parent=11 // pred_check
        %p347 = pneg %p129
      $region26: #{_lambda_.1} parent=11 // pred_check_branch
        %349 = sbr.rel (%p347) target = $region28
      $region27: #{_lambda_.1} parent=11 // pred_region
        _
      $region28: #{_lambda_.1} parent=11 // pred_fallthru
        _
      // Predicated region
      $region29: #{_lambda_.1} parent=11 // pred_check
        %p350 = pneg %p150
      $region30: #{_lambda_.1} parent=11 // pred_check_branch
        %352 = sbr.rel (%p350) target = $region32
      $region31: #{_lambda_.1} parent=11 // pred_region
        _
      $region32: #{_lambda_.1} parent=11 // pred_fallthru
        _
      // Predicated region
      $region33: #{_lambda_.1} parent=11 // pred_check
        %p353 = pneg %p171
      $region34: #{_lambda_.1} parent=11 // pred_check_branch
        %355 = sbr.rel (%p353) target = $region36
      $region35: #{_lambda_.1} parent=11 // pred_region
        _
      $region36: #{_lambda_.1} parent=11 // pred_fallthru
        _
      // Predicated region
      $region37: #{_lambda_.1} parent=11 // pred_check
        %p356 = pneg %p192
      $region38: #{_lambda_.1} parent=11 // pred_check_branch
        %358 = sbr.rel (%p356) target = $region40
      $region39: #{_lambda_.1} parent=11 // pred_region
        _
      $region40: #{_lambda_.1} parent=11 // pred_fallthru
        _
      // Predicated region
      $region41: #{_lambda_.1} parent=11 // pred_check
        %p359 = pneg %p213
      $region42: #{_lambda_.1} parent=11 // pred_check_branch
        %361 = sbr.rel (%p359) target = $region44
      $region43: #{_lambda_.1} parent=11 // pred_region
        _
      $region44: #{_lambda_.1} parent=11 // pred_fallthru
        _
      // Predicated region
      $region45: #{_lambda_.1} parent=11 // pred_check
        %p362 = pneg %p234
      $region46: #{_lambda_.1} parent=11 // pred_check_branch
        %364 = sbr.rel (%p362) target = $region48
      $region47: #{_lambda_.1} parent=11 // pred_region
        _
      $region48: #{_lambda_.1} parent=11 // pred_fallthru
        _
      // Predicated region
      $region49: #{_lambda_.1} parent=11 // pred_check
        %p365 = pneg %p255
      $region50: #{_lambda_.1} parent=11 // pred_check_branch
        %367 = sbr.rel (%p365) target = $region52
      $region51: #{_lambda_.1} parent=11 // pred_region
        _
      $region52: #{_lambda_.1} parent=11 // pred_fallthru
        _
      // Predicated region
      $region53: #{_lambda_.1} parent=11 // pred_check
        %p368 = pneg %p276
      $region54: #{_lambda_.1} parent=11 // pred_check_branch
        %370 = sbr.rel (%p368) target = $region56
      $region55: #{_lambda_.1} parent=11 // pred_region
        _
      $region56: #{_lambda_.1} parent=11 // pred_fallthru
        _
      // Predicated region
      $region57: #{_lambda_.1} parent=11 // pred_check
        %p371 = pneg %p297
      $region58: #{_lambda_.1} parent=11 // pred_check_branch
        %373 = sbr.rel (%p371) target = $region60
      $region59: #{_lambda_.1} parent=11 // pred_region
        _
      $region60: #{_lambda_.1} parent=11 // pred_fallthru
        _
    $region12: #{_lambda_.1} parent=5 // pred_fallthru
      _
    %p374 = scmp.lt.s32.totalorder %s19, 2
    // Predicated region
    $region61: #{_lambda_.1} parent=5 // pred_check
      %p375 = pneg %p374
    $region62: #{_lambda_.1} parent=5 // pred_check_branch
      %377 = sbr.rel (%p375) target = $region64
    $region63: #{_lambda_.1} parent=5 // pred_region
      // Predicated region
      $region65: #{_lambda_.1} parent=63 // pred_check
        %p378 = pneg %p39
      $region66: #{_lambda_.1} parent=63 // pred_check_branch
        %380 = sbr.rel (%p378) target = $region68
      $region67: #{_lambda_.1} parent=63 // pred_region
        %p381 = scmp.lt.s32.totalorder %s19, 1
        %s382 = scalar_select %p381, %s19, 1
        %s383 = smul.addr %s382, 2
        %s384 = smul.addr %s383, 4
        %s385 = scalar_lea.vmem %s0, %s384
      $region68: #{_lambda_.1} parent=63 // pred_fallthru
        _
    $region64: #{_lambda_.1} parent=5 // pred_fallthru
      _
    %p386 = scmp.le.s32.totalorder 1, %s19
    %p387 = scmp.lt.s32.totalorder %s19, 3
    %p388 = pnand %p386, %p387
    %p389 = pneg %p388
    // Predicated region
    $region69: #{_lambda_.1} parent=5 // pred_check
      _
    $region70: #{_lambda_.1} parent=5 // pred_check_branch
      %391 = sbr.rel (%p388) target = $region72
    $region71: #{_lambda_.1} parent=5 // pred_region
      %s392 = ssub.s32 %s19, 1
      %p393 = scmp.lt.s32.totalorder %s24, 1
      %s394 = scalar_select %p393, %s24, 1
      %s395 = smul.addr %s394, 2
      %s396 = smul.addr %s395, 4
      %s397 = scalar_lea.vmem %s0, %s396
      %p398 = pneg %p45
      %p399 = pneg %p42
      %p400 = pneg %p66
      %p401 = pneg %p63
      %p402 = pneg %p87
      %p403 = pneg %p84
      %p404 = pneg %p108
      %p405 = pneg %p105
      %p406 = pneg %p129
      %p407 = pneg %p126
      %p408 = pneg %p150
      %p409 = pneg %p147
      %p410 = pneg %p171
      %p411 = pneg %p168
      %p412 = pneg %p192
      %p413 = pneg %p189
      %p414 = pneg %p213
      %p415 = pneg %p210
      %p416 = pneg %p234
      %p417 = pneg %p231
      %p418 = pneg %p255
      %p419 = pneg %p252
      %p420 = pneg %p276
      %p421 = pneg %p273
      %p422 = pneg %p297
      %p423 = pneg %p294
      %p424 = pneg %p323
      %p425 = pneg %p320
      %p426 = scmp.lt.s32.totalorder %s24, 1
      %s427 = scalar_select %p426, %s24, 1
      %s428 = smul.addr %s427, 4
      %s429 = scalar_lea.vmem %s13, %s428
      %p430 = scmp.lt.s32.totalorder %s24, 1
      %s431 = scalar_select %p430, %s24, 1
      %s432 = smul.addr %s431, 2
      %s433 = smul.addr %s432, 4
      %s434 = scalar_lea.vmem %s0, %s433
      %p435 = scmp.lt.s32.totalorder %s24, 1
      %s436 = scalar_select %p435, %s24, 1
      %s437 = smul.addr %s436, 4
      %s438 = scalar_lea.vmem %s13, %s437
      %v441 = vld [vmem:[%s434] sm:$0xf]
      %v442 = vld [vmem:[%s434 + $0x4] sm:$0xf]
      %v443 = vld [vmem:[%s1] sm:$0xf]
      %v444 = vld [vmem:[%s2] sm:$0xf]
      %v445 = vld [vmem:[%s2 + $0x4] sm:$0xf]
      %v446 = vld [vmem:[%s2 + $0x8] sm:$0xf]
      %v447 = vld [vmem:[%s2 + $0xc] sm:$0xf]
      %v448 = vld [vmem:[%s2 + $0x10] sm:$0xf]
      %v449 = vld [vmem:[%s2 + $0x14] sm:$0xf]
      %v450 = vld [vmem:[%s2 + $0x18] sm:$0xf]
      %v451 = vld [vmem:[%s2 + $0x1c] sm:$0xf]
      %v454 = vunpack.c.l.b16 %v441
      %v455 = vunpack.c.l.b16 %v442
      %v456 = vpack.c.b16 %v455, %v454
      %457 = vrot.lane.b32.xlu0 %v456, 124
      %v458 = vpop.permute.xlu0 %457
      %vm459 = vcmask 490496
      %v462 = vsel %vm459, %v458, 4286644096
      %v465 = vmax.bf16 %v462, %v456
      %466 = vrot.lane.b32.xlu0 %v456, 4
      %v467 = vpop.permute.xlu0 %466
      %vm468 = vcmask 31744
      %v470 = vsel %vm468, 4286644096, %v467
      %v472 = vmax.bf16 %v465, %v470
      %v474 = vshrl.u32 %v472, 16
      %v476 = vshll.u32 %v472, 16
      %v478 = vrot.slane %v476, 1
      %v479 = vor.u32 %v474, %v478
      %vm481 = vcmask 1047552
      %vm482 = vsmask.f32 7424
      %vm483 = vmand %vm481, %vm482
      %v484 = vsel %vm483, %v479, 4286644096
      %v485 = vmax.bf16 %v484, %v472
      %v486 = vrot.slane %v474, 7
      %v487 = vor.u32 %v486, %v476
      %vm489 = vcmask 1040384
      %vm490 = vsmask.f32 256
      %vm491 = vmand %vm489, %vm490
      %v492 = vsel %vm491, 4286644096, %v487
      %v493 = vmax.bf16 %v485, %v492
      %vm494 = vcmask 130048
      %v496 = vsel %vm494, %v443, 0
      %498 = vmatprep.subr.bf16.mxu0 0
      %499 = vmatpush1.bf16.msra.mxu0 0
      %500 = vmatprep.subr.bf16.mxu0 0
      %501 = vmatpush1.bf16.msra.mxu0 0
      %502 = vmatprep.subr.bf16.mxu0 0
      %503 = vmatpush1.bf16.msra.mxu0 0
      %504 = vmatprep.subr.bf16.mxu0 0
      %505 = vmatpush1.bf16.msra.mxu0 0
      %506 = vmatprep.subr.bf16.mxu0 0
      %507 = vmatpush1.bf16.msra.mxu0 0
      %508 = vmatprep.subr.bf16.mxu0 0
      %509 = vmatpush1.bf16.msra.mxu0 0
      %510 = vmatprep.subr.bf16.mxu0 0
      %511 = vmatpush1.bf16.msra.mxu0 0
      %512 = vmatprep.subr.bf16.mxu0 0
      %513 = vmatpush1.bf16.msra.mxu0 %v493
      %514 = vmatprep.subr.bf16.mxu0 0
      %515 = vmatpush2.bf16.msra.mxu0 0
      %516 = vmatprep.subr.bf16.mxu0 0
      %517 = vmatpush2.bf16.msra.mxu0 0
      %518 = vmatprep.subr.bf16.mxu0 0
      %519 = vmatpush2.bf16.msra.mxu0 0
      %520 = vmatprep.subr.bf16.mxu0 0
      %521 = vmatpush2.bf16.msra.mxu0 0
      %522 = vmatprep.subr.bf16.mxu0 0
      %523 = vmatpush2.bf16.msra.mxu0 0
      %524 = vmatprep.subr.bf16.mxu0 0
      %525 = vmatpush2.bf16.msra.mxu0 0
      %526 = vmatprep.subr.bf16.mxu0 0
      %527 = vmatpush2.bf16.msra.mxu0 0
      %528 = vmatprep.subr.bf16.mxu0 0
      %529 = vmatpush2.bf16.msra.mxu0 0
      %530 = vmatprep.mubr.bf16.mxu0 0
      %531 = vmatmul.mubr.bf16.gmra.mxu0 %v496
      %v532 = vpop.f32.mrf.mxu0
      %v533 = vadd.f32 0.0, %v532
      %v534 = vpop.f32.mrf.mxu0
      %v535 = vpop.f32.mrf.mxu0
      %v536 = vpop.f32.mrf.mxu0
      %537 = vdwg.mxu0
      %v538 = vpack.c.bf16 %v533, %v533
      %v547 = vunpack.c.l.b16 %v444
      %v548 = vunpack.c.l.b16 %v445
      %v549 = vunpack.c.l.b16 %v446
      %v550 = vunpack.c.l.b16 %v447
      %v551 = vunpack.c.l.b16 %v448
      %v552 = vunpack.c.l.b16 %v449
      %v553 = vunpack.c.l.b16 %v450
      %v554 = vunpack.c.l.b16 %v451
      %v555 = vpack.c.b16 %v548, %v547
      %v556 = vpack.c.b16 %v550, %v549
      %v557 = vpack.c.b16 %v552, %v551
      %v558 = vpack.c.b16 %v554, %v553
      %vm563 = vcmask 523264
      %v565 = vsel %vm563, %v538, 0
      %567 = vmatprep.subr.bf16.mxu0 0
      %568 = vmatpush1.bf16.msra.mxu0 0
      %569 = vmatprep.subr.bf16.mxu0 0
      %570 = vmatpush1.bf16.msra.mxu0 0
      %571 = vmatprep.subr.bf16.mxu0 0
      %572 = vmatpush1.bf16.msra.mxu0 0
      %573 = vmatprep.subr.bf16.mxu0 0
      %574 = vmatpush1.bf16.msra.mxu0 0
      %575 = vmatprep.subr.bf16.mxu0 0
      %576 = vmatpush1.bf16.msra.mxu0 %v558
      %577 = vmatprep.subr.bf16.mxu0 0
      %578 = vmatpush1.bf16.msra.mxu0 %v557
      %579 = vmatprep.subr.bf16.mxu0 0
      %580 = vmatpush1.bf16.msra.mxu0 %v556
      %581 = vmatprep.subr.bf16.mxu0 0
      %582 = vmatpush1.bf16.msra.mxu0 %v555
      %583 = vmatprep.subr.bf16.mxu0 0
      %584 = vmatpush2.bf16.msra.mxu0 0
      %585 = vmatprep.subr.bf16.mxu0 0
      %586 = vmatpush2.bf16.msra.mxu0 0
      %587 = vmatprep.subr.bf16.mxu0 0
      %588 = vmatpush2.bf16.msra.mxu0 0
      %589 = vmatprep.subr.bf16.mxu0 0
      %590 = vmatpush2.bf16.msra.mxu0 0
      %591 = vmatprep.subr.bf16.mxu0 0
      %592 = vmatpush2.bf16.msra.mxu0 0
      %593 = vmatprep.subr.bf16.mxu0 0
      %594 = vmatpush2.bf16.msra.mxu0 0
      %595 = vmatprep.subr.bf16.mxu0 0
      %596 = vmatpush2.bf16.msra.mxu0 0
      %597 = vmatprep.subr.bf16.mxu0 0
      %598 = vmatpush2.bf16.msra.mxu0 0
      %599 = vmatprep.mubr.bf16.mxu0 0
      %600 = vmatmul.mubr.bf16.gmra.mxu0 %v565
      %v601 = vpop.f32.mrf.mxu0
      %v602 = vadd.f32 0.0, %v601
      %v603 = vpop.f32.mrf.mxu0
      %v604 = vpop.f32.mrf.mxu0
      %v605 = vpop.f32.mrf.mxu0
      %606 = vdwg.mxu0
      %v607 = vpack.c.bf16 %v602, %v602
      %v608 = vld [vmem:[%s3] sm:$0xf]
      %v609 = vld [vmem:[%s3 + $0x4] sm:$0xf]
      %v610 = vld [vmem:[%s3 + $0x8] sm:$0xf]
      %v611 = vld [vmem:[%s3 + $0xc] sm:$0xf]
      %v612 = vld [vmem:[%s3 + $0x10] sm:$0xf]
      %v613 = vld [vmem:[%s3 + $0x14] sm:$0xf]
      %v614 = vld [vmem:[%s3 + $0x18] sm:$0xf]
      %v615 = vld [vmem:[%s3 + $0x1c] sm:$0xf]
      %v616 = vld [vmem:[%s3 + $0x20] sm:$0xf]
      %v617 = vld [vmem:[%s3 + $0x24] sm:$0xf]
      %v618 = vld [vmem:[%s3 + $0x28] sm:$0xf]
      %v619 = vld [vmem:[%s3 + $0x2c] sm:$0xf]
      %v621 = vshrl.u32 %v607, 16
      %v623 = vrot.slane %v621, 7
      %v624 = vshll.u32 %v607, 16
      %v626 = vor.u32 %v623, %v624
      %v628 = vsel %vm491, 0, %v626
      %v629 = vrot.slane %v624, 1
      %v630 = vor.u32 %v621, %v629
      %vm632 = vcmask 1043456
      %vm633 = vsmask.f32 3328
      %vm634 = vmand %vm632, %vm633
      %v635 = vsel %vm634, %v630, 0
      %637 = vrot.lane.b32.xlu0 %v607, 32
      %v638 = vpop.permute.xlu0 %637
      %640 = vrot.lane.b32.xlu0 %v635, 64
      %v641 = vpop.permute.xlu0 %640
      %vm642 = vcmask 261120
      %v645 = vsel %vm642, %v628, %v638
      %v647 = vsel %vm563, %v645, %v641
      %v648 = vld [vmem:[%s4] sm:$0xf]
      %v649 = vld [vmem:[%s4 + $0x4] sm:$0xf]
      %v650 = vld [vmem:[%s4 + $0x8] sm:$0xf]
      %v651 = vld [vmem:[%s4 + $0xc] sm:$0xf]
      %v652 = vld [vmem:[%s4 + $0x10] sm:$0xf]
      %v653 = vld [vmem:[%s4 + $0x14] sm:$0xf]
      %v654 = vld [vmem:[%s4 + $0x18] sm:$0xf]
      %v655 = vld [vmem:[%s4 + $0x1c] sm:$0xf]
      %v656 = vld [vmem:[%s4 + $0x20] sm:$0xf]
      %v657 = vld [vmem:[%s4 + $0x24] sm:$0xf]
      %v658 = vld [vmem:[%s4 + $0x28] sm:$0xf]
      %v659 = vld [vmem:[%s4 + $0x2c] sm:$0xf]
      %v660 = vld [vmem:[%s5] sm:$0x1]
      %v662 = vlaneseq
      %v663 = vshrl.u32 %v662, 7
      %v664 = vsub.s32 0, %v663
      %v665 = vrot.slane %v660, %v664
      %v679 = vunpack.c.l.b16 %v648
      %v680 = vunpack.c.l.b16 %v649
      %v681 = vunpack.c.l.b16 %v650
      %v682 = vunpack.c.l.b16 %v651
      %v683 = vunpack.c.l.b16 %v652
      %v684 = vunpack.c.l.b16 %v653
      %v685 = vunpack.c.l.b16 %v654
      %v686 = vunpack.c.l.b16 %v655
      %v687 = vunpack.c.l.b16 %v656
      %v688 = vunpack.c.l.b16 %v657
      %v689 = vunpack.c.l.b16 %v658
      %v690 = vunpack.c.l.b16 %v659
      %v691 = vpack.c.b16 %v680, %v679
      %v692 = vpack.c.b16 %v682, %v681
      %v693 = vpack.c.b16 %v684, %v683
      %v694 = vpack.c.b16 %v686, %v685
      %v695 = vpack.c.b16 %v688, %v687
      %v696 = vpack.c.b16 %v690, %v689
      %vm703 = vcmask 785408
      %v704 = vsel %vm703, %v647, 0
      %706 = vmatprep.subr.bf16.mxu0 0
      %707 = vmatpush1.bf16.msra.mxu0 0
      %708 = vmatprep.subr.bf16.mxu0 0
      %709 = vmatpush1.bf16.msra.mxu0 0
      %710 = vmatprep.subr.bf16.mxu0 0
      %711 = vmatpush1.bf16.msra.mxu0 %v696
      %712 = vmatprep.subr.bf16.mxu0 0
      %713 = vmatpush1.bf16.msra.mxu0 %v695
      %714 = vmatprep.subr.bf16.mxu0 0
      %715 = vmatpush1.bf16.msra.mxu0 %v694
      %716 = vmatprep.subr.bf16.mxu0 0
      %717 = vmatpush1.bf16.msra.mxu0 %v693
      %718 = vmatprep.subr.bf16.mxu0 0
      %719 = vmatpush1.bf16.msra.mxu0 %v692
      %720 = vmatprep.subr.bf16.mxu0 0
      %721 = vmatpush1.bf16.msra.mxu0 %v691
      %722 = vmatprep.subr.bf16.mxu0 0
      %723 = vmatpush2.bf16.msra.mxu0 0
      %724 = vmatprep.subr.bf16.mxu0 0
      %725 = vmatpush2.bf16.msra.mxu0 0
      %726 = vmatprep.subr.bf16.mxu0 0
      %727 = vmatpush2.bf16.msra.mxu0 0
      %728 = vmatprep.subr.bf16.mxu0 0
      %729 = vmatpush2.bf16.msra.mxu0 0
      %730 = vmatprep.subr.bf16.mxu0 0
      %731 = vmatpush2.bf16.msra.mxu0 0
      %732 = vmatprep.subr.bf16.mxu0 0
      %733 = vmatpush2.bf16.msra.mxu0 0
      %734 = vmatprep.subr.bf16.mxu0 0
      %735 = vmatpush2.bf16.msra.mxu0 0
      %736 = vmatprep.subr.bf16.mxu0 0
      %737 = vmatpush2.bf16.msra.mxu0 0
      %738 = vmatprep.mubr.bf16.mxu0 0
      %739 = vmatmul.mubr.bf16.gmra.mxu0 %v704
      %v740 = vpop.f32.mrf.mxu0
      %v741 = vadd.f32 %v665, %v740
      %v742 = vpop.f32.mrf.mxu0
      %v743 = vpop.f32.mrf.mxu0
      %v744 = vpop.f32.mrf.mxu0
      %745 = vdwg.mxu0
      %v746 = vmax.f32 %v741, 0.0
      %v747 = vpack.c.bf16 %v746, %v746
      %v748 = vld [vmem:[%s6] sm:$0xf]
      %v749 = vld [vmem:[%s6 + $0x4] sm:$0xf]
      %v750 = vld [vmem:[%s6 + $0x8] sm:$0xf]
      %v751 = vld [vmem:[%s6 + $0xc] sm:$0xf]
      %v752 = vld [vmem:[%s6 + $0x10] sm:$0xf]
      %v753 = vld [vmem:[%s6 + $0x14] sm:$0xf]
      %v754 = vld [vmem:[%s6 + $0x18] sm:$0xf]
      %v755 = vld [vmem:[%s6 + $0x1c] sm:$0xf]
      %v756 = vld [vmem:[%s6 + $0x20] sm:$0xf]
      %v757 = vld [vmem:[%s6 + $0x24] sm:$0xf]
      %v758 = vld [vmem:[%s6 + $0x28] sm:$0xf]
      %v759 = vld [vmem:[%s6 + $0x2c] sm:$0xf]
      %v760 = vld [vmem:[%s6 + $0x30] sm:$0xf]
      %v761 = vld [vmem:[%s6 + $0x34] sm:$0xf]
      %v762 = vld [vmem:[%s6 + $0x38] sm:$0xf]
      %v763 = vld [vmem:[%s6 + $0x3c] sm:$0xf]
      %v764 = vld [vmem:[%s6 + $0x40] sm:$0xf]
      %v765 = vld [vmem:[%s6 + $0x44] sm:$0xf]
      %v766 = vld [vmem:[%s6 + $0x48] sm:$0xf]
      %v767 = vld [vmem:[%s6 + $0x4c] sm:$0xf]
      %v768 = vld [vmem:[%s6 + $0x50] sm:$0xf]
      %v769 = vld [vmem:[%s6 + $0x54] sm:$0xf]
      %v770 = vld [vmem:[%s6 + $0x58] sm:$0xf]
      %v771 = vld [vmem:[%s6 + $0x5c] sm:$0xf]
      %v772 = vld [vmem:[%s6 + $0x60] sm:$0xf]
      %v773 = vld [vmem:[%s6 + $0x64] sm:$0xf]
      %v774 = vld [vmem:[%s6 + $0x68] sm:$0xf]
      %v775 = vld [vmem:[%s6 + $0x6c] sm:$0xf]
      %v776 = vld [vmem:[%s6 + $0x70] sm:$0xf]
      %v777 = vld [vmem:[%s6 + $0x74] sm:$0xf]
      %v778 = vld [vmem:[%s6 + $0x78] sm:$0xf]
      %v779 = vld [vmem:[%s6 + $0x7c] sm:$0xf]
      %v780 = vld [vmem:[%s6 + $0x80] sm:$0xf]
      %v781 = vld [vmem:[%s6 + $0x84] sm:$0xf]
      %v782 = vld [vmem:[%s6 + $0x88] sm:$0xf]
      %v783 = vld [vmem:[%s6 + $0x8c] sm:$0xf]
      %v784 = vld [vmem:[%s6 + $0x90] sm:$0xf]
      %v785 = vld [vmem:[%s6 + $0x94] sm:$0xf]
      %v786 = vld [vmem:[%s6 + $0x98] sm:$0xf]
      %v787 = vld [vmem:[%s6 + $0x9c] sm:$0xf]
      %v788 = vld [vmem:[%s6 + $0xa0] sm:$0xf]
      %v789 = vld [vmem:[%s6 + $0xa4] sm:$0xf]
      %v790 = vld [vmem:[%s6 + $0xa8] sm:$0xf]
      %v791 = vld [vmem:[%s6 + $0xac] sm:$0xf]
      %v792 = vld [vmem:[%s6 + $0xb0] sm:$0xf]
      %v793 = vld [vmem:[%s6 + $0xb4] sm:$0xf]
      %v794 = vld [vmem:[%s6 + $0xb8] sm:$0xf]
      %v795 = vld [vmem:[%s6 + $0xbc] sm:$0xf]
      %v797 = vshrl.u32 %v747, 16
      %v799 = vrot.slane %v797, 7
      %v800 = vshll.u32 %v747, 16
      %v802 = vor.u32 %v799, %v800
      %v804 = vsel %vm491, 0, %v802
      %v805 = vrot.slane %v800, 1
      %v806 = vor.u32 %v797, %v805
      %v808 = vsel %vm634, %v806, 0
      %v857 = vunpack.c.l.b16 %v748
      %v858 = vunpack.c.l.b16 %v749
      %v859 = vunpack.c.l.b16 %v750
      %v860 = vunpack.c.l.b16 %v751
      %v861 = vunpack.c.l.b16 %v752
      %v862 = vunpack.c.l.b16 %v753
      %v863 = vunpack.c.l.b16 %v754
      %v864 = vunpack.c.l.b16 %v755
      %v865 = vunpack.c.l.b16 %v756
      %v866 = vunpack.c.l.b16 %v757
      %v867 = vunpack.c.l.b16 %v758
      %v868 = vunpack.c.l.b16 %v759
      %v869 = vunpack.c.l.b16 %v760
      %v870 = vunpack.c.l.b16 %v761
      %v871 = vunpack.c.l.b16 %v762
      %v872 = vunpack.c.l.b16 %v763
      %v873 = vunpack.c.l.b16 %v764
      %v874 = vunpack.c.l.b16 %v765
      %v875 = vunpack.c.l.b16 %v766
      %v876 = vunpack.c.l.b16 %v767
      %v877 = vunpack.c.l.b16 %v768
      %v878 = vunpack.c.l.b16 %v769
      %v879 = vunpack.c.l.b16 %v770
      %v880 = vunpack.c.l.b16 %v771
      %v881 = vunpack.c.l.b16 %v772
      %v882 = vunpack.c.l.b16 %v773
      %v883 = vunpack.c.l.b16 %v774
      %v884 = vunpack.c.l.b16 %v775
      %v885 = vunpack.c.l.b16 %v776
      %v886 = vunpack.c.l.b16 %v777
      %v887 = vunpack.c.l.b16 %v778
      %v888 = vunpack.c.l.b16 %v779
      %v889 = vunpack.c.l.b16 %v780
      %v890 = vunpack.c.l.b16 %v781
      %v891 = vunpack.c.l.b16 %v782
      %v892 = vunpack.c.l.b16 %v783
      %v893 = vunpack.c.l.b16 %v784
      %v894 = vunpack.c.l.b16 %v785
      %v895 = vunpack.c.l.b16 %v786
      %v896 = vunpack.c.l.b16 %v787
      %v897 = vunpack.c.l.b16 %v788
      %v898 = vunpack.c.l.b16 %v789
      %v899 = vunpack.c.l.b16 %v790
      %v900 = vunpack.c.l.b16 %v791
      %v901 = vunpack.c.l.b16 %v792
      %v902 = vunpack.c.l.b16 %v793
      %v903 = vunpack.c.l.b16 %v794
      %v904 = vunpack.c.l.b16 %v795
      %v905 = vpack.c.b16 %v858, %v857
      %v906 = vpack.c.b16 %v860, %v859
      %v907 = vpack.c.b16 %v862, %v861
      %v908 = vpack.c.b16 %v864, %v863
      %v909 = vpack.c.b16 %v866, %v865
      %v910 = vpack.c.b16 %v868, %v867
      %v911 = vpack.c.b16 %v870, %v869
      %v912 = vpack.c.b16 %v872, %v871
      %v913 = vpack.c.b16 %v874, %v873
      %v914 = vpack.c.b16 %v876, %v875
      %v915 = vpack.c.b16 %v878, %v877
      %v916 = vpack.c.b16 %v880, %v879
      %v917 = vpack.c.b16 %v882, %v881
      %v918 = vpack.c.b16 %v884, %v883
      %v919 = vpack.c.b16 %v886, %v885
      %v920 = vpack.c.b16 %v888, %v887
      %v921 = vpack.c.b16 %v890, %v889
      %v922 = vpack.c.b16 %v892, %v891
      %v923 = vpack.c.b16 %v894, %v893
      %v924 = vpack.c.b16 %v896, %v895
      %v925 = vpack.c.b16 %v898, %v897
      %v926 = vpack.c.b16 %v900, %v899
      %v927 = vpack.c.b16 %v902, %v901
      %v928 = vpack.c.b16 %v904, %v903
      %953 = vmatprep.subr.bf16.mxu0 0
      %954 = vmatpush1.bf16.msra.mxu0 %v912
      %955 = vmatprep.subr.bf16.mxu0 0
      %956 = vmatpush1.bf16.msra.mxu0 %v911
      %957 = vmatprep.subr.bf16.mxu0 0
      %958 = vmatpush1.bf16.msra.mxu0 %v910
      %959 = vmatprep.subr.bf16.mxu0 0
      %960 = vmatpush1.bf16.msra.mxu0 %v909
      %961 = vmatprep.subr.bf16.mxu0 0
      %962 = vmatpush1.bf16.msra.mxu0 %v908
      %963 = vmatprep.subr.bf16.mxu0 0
      %964 = vmatpush1.bf16.msra.mxu0 %v907
      %965 = vmatprep.subr.bf16.mxu0 0
      %966 = vmatpush1.bf16.msra.mxu0 %v906
      %967 = vmatprep.subr.bf16.mxu0 0
      %968 = vmatpush1.bf16.msra.mxu0 %v905
      %969 = vmatprep.subr.bf16.mxu0 0
      %970 = vmatpush2.bf16.msra.mxu0 %v920
      %971 = vmatprep.subr.bf16.mxu0 0
      %972 = vmatpush2.bf16.msra.mxu0 %v919
      %973 = vmatprep.subr.bf16.mxu0 0
      %974 = vmatpush2.bf16.msra.mxu0 %v918
      %975 = vmatprep.subr.bf16.mxu0 0
      %976 = vmatpush2.bf16.msra.mxu0 %v917
      %977 = vmatprep.subr.bf16.mxu0 0
      %978 = vmatpush2.bf16.msra.mxu0 %v916
      %979 = vmatprep.subr.bf16.mxu0 0
      %980 = vmatpush2.bf16.msra.mxu0 %v915
      %981 = vmatprep.subr.bf16.mxu0 0
      %982 = vmatpush2.bf16.msra.mxu0 %v914
      %983 = vmatprep.subr.bf16.mxu0 0
      %984 = vmatpush2.bf16.msra.mxu0 %v913
      %985 = vmatprep.mubr.bf16.mxu0 %v747
      %986 = vmatmul.mubr.bf16.gmra.mxu0 %v804
      %v987 = vpop.f32.mrf.mxu0
      %v988 = vadd.f32 0.0, %v987
      %v989 = vpop.f32.mrf.mxu0
      %v990 = vpop.f32.mrf.mxu0
      %v991 = vpop.f32.mrf.mxu0
      %992 = vdwg.mxu0
      %993 = vmatprep.subr.bf16.mxu0 0
      %994 = vmatpush1.bf16.msra.mxu0 %v928
      %995 = vmatprep.subr.bf16.mxu0 0
      %996 = vmatpush1.bf16.msra.mxu0 %v927
      %997 = vmatprep.subr.bf16.mxu0 0
      %998 = vmatpush1.bf16.msra.mxu0 %v926
      %999 = vmatprep.subr.bf16.mxu0 0
      %1000 = vmatpush1.bf16.msra.mxu0 %v925
      %1001 = vmatprep.subr.bf16.mxu0 0
      %1002 = vmatpush1.bf16.msra.mxu0 %v924
      %1003 = vmatprep.subr.bf16.mxu0 0
      %1004 = vmatpush1.bf16.msra.mxu0 %v923
      %1005 = vmatprep.subr.bf16.mxu0 0
      %1006 = vmatpush1.bf16.msra.mxu0 %v922
      %1007 = vmatprep.subr.bf16.mxu0 0
      %1008 = vmatpush1.bf16.msra.mxu0 %v921
      %1009 = vmatprep.subr.bf16.mxu0 0
      %1010 = vmatpush2.bf16.msra.mxu0 0
      %1011 = vmatprep.subr.bf16.mxu0 0
      %1012 = vmatpush2.bf16.msra.mxu0 0
      %1013 = vmatprep.subr.bf16.mxu0 0
      %1014 = vmatpush2.bf16.msra.mxu0 0
      %1015 = vmatprep.subr.bf16.mxu0 0
      %1016 = vmatpush2.bf16.msra.mxu0 0
      %1017 = vmatprep.subr.bf16.mxu0 0
      %1018 = vmatpush2.bf16.msra.mxu0 0
      %1019 = vmatprep.subr.bf16.mxu0 0
      %1020 = vmatpush2.bf16.msra.mxu0 0
      %1021 = vmatprep.subr.bf16.mxu0 0
      %1022 = vmatpush2.bf16.msra.mxu0 0
      %1023 = vmatprep.subr.bf16.mxu0 0
      %1024 = vmatpush2.bf16.msra.mxu0 0
      %1025 = vmatprep.mubr.bf16.mxu0 0
      %1026 = vmatmul.mubr.bf16.gmra.mxu0 %v808
      %v1027 = vpop.f32.mrf.mxu0
      %v1028 = vadd.f32 %v988, %v1027
      %v1029 = vpop.f32.mrf.mxu0
      %v1030 = vpop.f32.mrf.mxu0
      %v1031 = vpop.f32.mrf.mxu0
      %1032 = vdwg.mxu0
      %v1033 = vld [vmem:[%s7] sm:$0xf]
      %v1034 = vld [vmem:[%s7 + $0x4] sm:$0xf]
      %v1035 = vld [vmem:[%s7 + $0x8] sm:$0xf]
      %v1036 = vld [vmem:[%s7 + $0xc] sm:$0xf]
      %v1037 = vld [vmem:[%s7 + $0x10] sm:$0xf]
      %v1038 = vld [vmem:[%s7 + $0x14] sm:$0xf]
      %v1039 = vld [vmem:[%s7 + $0x18] sm:$0xf]
      %v1040 = vld [vmem:[%s7 + $0x1c] sm:$0xf]
      %v1041 = vld [vmem:[%s7 + $0x20] sm:$0xf]
      %v1042 = vld [vmem:[%s7 + $0x24] sm:$0xf]
      %v1043 = vld [vmem:[%s7 + $0x28] sm:$0xf]
      %v1044 = vld [vmem:[%s7 + $0x2c] sm:$0xf]
      %v1045 = vld [vmem:[%s8] sm:$0x1]
      %v1047 = vlaneseq
      %v1048 = vshrl.u32 %v1047, 7
      %v1049 = vsub.s32 0, %v1048
      %v1050 = vrot.slane %v1045, %v1049
      %v1064 = vunpack.c.l.b16 %v1033
      %v1065 = vunpack.c.l.b16 %v1034
      %v1066 = vunpack.c.l.b16 %v1035
      %v1067 = vunpack.c.l.b16 %v1036
      %v1068 = vunpack.c.l.b16 %v1037
      %v1069 = vunpack.c.l.b16 %v1038
      %v1070 = vunpack.c.l.b16 %v1039
      %v1071 = vunpack.c.l.b16 %v1040
      %v1072 = vunpack.c.l.b16 %v1041
      %v1073 = vunpack.c.l.b16 %v1042
      %v1074 = vunpack.c.l.b16 %v1043
      %v1075 = vunpack.c.l.b16 %v1044
      %v1076 = vpack.c.b16 %v1065, %v1064
      %v1077 = vpack.c.b16 %v1067, %v1066
      %v1078 = vpack.c.b16 %v1069, %v1068
      %v1079 = vpack.c.b16 %v1071, %v1070
      %v1080 = vpack.c.b16 %v1073, %v1072
      %v1081 = vpack.c.b16 %v1075, %v1074
      %1088 = vmatprep.subr.bf16.mxu0 0
      %1089 = vmatpush1.bf16.msra.mxu0 0
      %1090 = vmatprep.subr.bf16.mxu0 0
      %1091 = vmatpush1.bf16.msra.mxu0 0
      %1092 = vmatprep.subr.bf16.mxu0 0
      %1093 = vmatpush1.bf16.msra.mxu0 %v1081
      %1094 = vmatprep.subr.bf16.mxu0 0
      %1095 = vmatpush1.bf16.msra.mxu0 %v1080
      %1096 = vmatprep.subr.bf16.mxu0 0
      %1097 = vmatpush1.bf16.msra.mxu0 %v1079
      %1098 = vmatprep.subr.bf16.mxu0 0
      %1099 = vmatpush1.bf16.msra.mxu0 %v1078
      %1100 = vmatprep.subr.bf16.mxu0 0
      %1101 = vmatpush1.bf16.msra.mxu0 %v1077
      %1102 = vmatprep.subr.bf16.mxu0 0
      %1103 = vmatpush1.bf16.msra.mxu0 %v1076
      %1104 = vmatprep.subr.bf16.mxu0 0
      %1105 = vmatpush2.bf16.msra.mxu0 0
      %1106 = vmatprep.subr.bf16.mxu0 0
      %1107 = vmatpush2.bf16.msra.mxu0 0
      %1108 = vmatprep.subr.bf16.mxu0 0
      %1109 = vmatpush2.bf16.msra.mxu0 0
      %1110 = vmatprep.subr.bf16.mxu0 0
      %1111 = vmatpush2.bf16.msra.mxu0 0
      %1112 = vmatprep.subr.bf16.mxu0 0
      %1113 = vmatpush2.bf16.msra.mxu0 0
      %1114 = vmatprep.subr.bf16.mxu0 0
      %1115 = vmatpush2.bf16.msra.mxu0 0
      %1116 = vmatprep.subr.bf16.mxu0 0
      %1117 = vmatpush2.bf16.msra.mxu0 0
      %1118 = vmatprep.subr.bf16.mxu0 0
      %1119 = vmatpush2.bf16.msra.mxu0 0
      %1120 = vmatprep.mubr.bf16.mxu0 0
      %1121 = vmatmul.mubr.bf16.gmra.mxu0 %v704
      %v1122 = vpop.f32.mrf.mxu0
      %v1123 = vadd.f32 %v1050, %v1122
      %v1124 = vpop.f32.mrf.mxu0
      %v1125 = vpop.f32.mrf.mxu0
      %v1126 = vpop.f32.mrf.mxu0
      %1127 = vdwg.mxu0
      %v1128 = vmax.f32 %v1123, 0.0
      %v1129 = vpack.c.bf16 %v1128, %v1128
      %v1130 = vld [vmem:[%s9] sm:$0xf]
      %v1131 = vld [vmem:[%s9 + $0x4] sm:$0xf]
      %v1132 = vld [vmem:[%s9 + $0x8] sm:$0xf]
      %v1133 = vld [vmem:[%s9 + $0xc] sm:$0xf]
      %v1134 = vld [vmem:[%s9 + $0x10] sm:$0xf]
      %v1135 = vld [vmem:[%s9 + $0x14] sm:$0xf]
      %v1136 = vld [vmem:[%s9 + $0x18] sm:$0xf]
      %v1137 = vld [vmem:[%s9 + $0x1c] sm:$0xf]
      %v1138 = vld [vmem:[%s9 + $0x20] sm:$0xf]
      %v1139 = vld [vmem:[%s9 + $0x24] sm:$0xf]
      %v1140 = vld [vmem:[%s9 + $0x28] sm:$0xf]
      %v1141 = vld [vmem:[%s9 + $0x2c] sm:$0xf]
      %v1142 = vld [vmem:[%s9 + $0x30] sm:$0xf]
      %v1143 = vld [vmem:[%s9 + $0x34] sm:$0xf]
      %v1144 = vld [vmem:[%s9 + $0x38] sm:$0xf]
      %v1145 = vld [vmem:[%s9 + $0x3c] sm:$0xf]
      %v1146 = vld [vmem:[%s9 + $0x40] sm:$0xf]
      %v1147 = vld [vmem:[%s9 + $0x44] sm:$0xf]
      %v1148 = vld [vmem:[%s9 + $0x48] sm:$0xf]
      %v1149 = vld [vmem:[%s9 + $0x4c] sm:$0xf]
      %v1150 = vld [vmem:[%s9 + $0x50] sm:$0xf]
      %v1151 = vld [vmem:[%s9 + $0x54] sm:$0xf]
      %v1152 = vld [vmem:[%s9 + $0x58] sm:$0xf]
      %v1153 = vld [vmem:[%s9 + $0x5c] sm:$0xf]
      %v1154 = vld [vmem:[%s9 + $0x60] sm:$0xf]
      %v1155 = vld [vmem:[%s9 + $0x64] sm:$0xf]
      %v1156 = vld [vmem:[%s9 + $0x68] sm:$0xf]
      %v1157 = vld [vmem:[%s9 + $0x6c] sm:$0xf]
      %v1158 = vld [vmem:[%s9 + $0x70] sm:$0xf]
      %v1159 = vld [vmem:[%s9 + $0x74] sm:$0xf]
      %v1160 = vld [vmem:[%s9 + $0x78] sm:$0xf]
      %v1161 = vld [vmem:[%s9 + $0x7c] sm:$0xf]
      %v1162 = vld [vmem:[%s9 + $0x80] sm:$0xf]
      %v1163 = vld [vmem:[%s9 + $0x84] sm:$0xf]
      %v1164 = vld [vmem:[%s9 + $0x88] sm:$0xf]
      %v1165 = vld [vmem:[%s9 + $0x8c] sm:$0xf]
      %v1166 = vld [vmem:[%s9 + $0x90] sm:$0xf]
      %v1167 = vld [vmem:[%s9 + $0x94] sm:$0xf]
      %v1168 = vld [vmem:[%s9 + $0x98] sm:$0xf]
      %v1169 = vld [vmem:[%s9 + $0x9c] sm:$0xf]
      %v1170 = vld [vmem:[%s9 + $0xa0] sm:$0xf]
      %v1171 = vld [vmem:[%s9 + $0xa4] sm:$0xf]
      %v1172 = vld [vmem:[%s9 + $0xa8] sm:$0xf]
      %v1173 = vld [vmem:[%s9 + $0xac] sm:$0xf]
      %v1174 = vld [vmem:[%s9 + $0xb0] sm:$0xf]
      %v1175 = vld [vmem:[%s9 + $0xb4] sm:$0xf]
      %v1176 = vld [vmem:[%s9 + $0xb8] sm:$0xf]
      %v1177 = vld [vmem:[%s9 + $0xbc] sm:$0xf]
      %v1179 = vshrl.u32 %v1129, 16
      %v1181 = vrot.slane %v1179, 7
      %v1182 = vshll.u32 %v1129, 16
      %v1184 = vor.u32 %v1181, %v1182
      %v1186 = vsel %vm491, 0, %v1184
      %v1187 = vrot.slane %v1182, 1
      %v1188 = vor.u32 %v1179, %v1187
      %v1190 = vsel %vm634, %v1188, 0
      %v1191 = vld [vmem:[%s10] sm:$0x1]
      %v1193 = vlaneseq
      %v1194 = vshrl.u32 %v1193, 7
      %v1195 = vsub.s32 0, %v1194
      %v1196 = vrot.slane %v1191, %v1195
      %v1246 = vunpack.c.l.b16 %v1130
      %v1247 = vunpack.c.l.b16 %v1131
      %v1248 = vunpack.c.l.b16 %v1132
      %v1249 = vunpack.c.l.b16 %v1133
      %v1250 = vunpack.c.l.b16 %v1134
      %v1251 = vunpack.c.l.b16 %v1135
      %v1252 = vunpack.c.l.b16 %v1136
      %v1253 = vunpack.c.l.b16 %v1137
      %v1254 = vunpack.c.l.b16 %v1138
      %v1255 = vunpack.c.l.b16 %v1139
      %v1256 = vunpack.c.l.b16 %v1140
      %v1257 = vunpack.c.l.b16 %v1141
      %v1258 = vunpack.c.l.b16 %v1142
      %v1259 = vunpack.c.l.b16 %v1143
      %v1260 = vunpack.c.l.b16 %v1144
      %v1261 = vunpack.c.l.b16 %v1145
      %v1262 = vunpack.c.l.b16 %v1146
      %v1263 = vunpack.c.l.b16 %v1147
      %v1264 = vunpack.c.l.b16 %v1148
      %v1265 = vunpack.c.l.b16 %v1149
      %v1266 = vunpack.c.l.b16 %v1150
      %v1267 = vunpack.c.l.b16 %v1151
      %v1268 = vunpack.c.l.b16 %v1152
      %v1269 = vunpack.c.l.b16 %v1153
      %v1270 = vunpack.c.l.b16 %v1154
      %v1271 = vunpack.c.l.b16 %v1155
      %v1272 = vunpack.c.l.b16 %v1156
      %v1273 = vunpack.c.l.b16 %v1157
      %v1274 = vunpack.c.l.b16 %v1158
      %v1275 = vunpack.c.l.b16 %v1159
      %v1276 = vunpack.c.l.b16 %v1160
      %v1277 = vunpack.c.l.b16 %v1161
      %v1278 = vunpack.c.l.b16 %v1162
      %v1279 = vunpack.c.l.b16 %v1163
      %v1280 = vunpack.c.l.b16 %v1164
      %v1281 = vunpack.c.l.b16 %v1165
      %v1282 = vunpack.c.l.b16 %v1166
      %v1283 = vunpack.c.l.b16 %v1167
      %v1284 = vunpack.c.l.b16 %v1168
      %v1285 = vunpack.c.l.b16 %v1169
      %v1286 = vunpack.c.l.b16 %v1170
      %v1287 = vunpack.c.l.b16 %v1171
      %v1288 = vunpack.c.l.b16 %v1172
      %v1289 = vunpack.c.l.b16 %v1173
      %v1290 = vunpack.c.l.b16 %v1174
      %v1291 = vunpack.c.l.b16 %v1175
      %v1292 = vunpack.c.l.b16 %v1176
      %v1293 = vunpack.c.l.b16 %v1177
      %v1294 = vpack.c.b16 %v1247, %v1246
      %v1295 = vpack.c.b16 %v1249, %v1248
      %v1296 = vpack.c.b16 %v1251, %v1250
      %v1297 = vpack.c.b16 %v1253, %v1252
      %v1298 = vpack.c.b16 %v1255, %v1254
      %v1299 = vpack.c.b16 %v1257, %v1256
      %v1300 = vpack.c.b16 %v1259, %v1258
      %v1301 = vpack.c.b16 %v1261, %v1260
      %v1302 = vpack.c.b16 %v1263, %v1262
      %v1303 = vpack.c.b16 %v1265, %v1264
      %v1304 = vpack.c.b16 %v1267, %v1266
      %v1305 = vpack.c.b16 %v1269, %v1268
      %v1306 = vpack.c.b16 %v1271, %v1270
      %v1307 = vpack.c.b16 %v1273, %v1272
      %v1308 = vpack.c.b16 %v1275, %v1274
      %v1309 = vpack.c.b16 %v1277, %v1276
      %v1310 = vpack.c.b16 %v1279, %v1278
      %v1311 = vpack.c.b16 %v1281, %v1280
      %v1312 = vpack.c.b16 %v1283, %v1282
      %v1313 = vpack.c.b16 %v1285, %v1284
      %v1314 = vpack.c.b16 %v1287, %v1286
      %v1315 = vpack.c.b16 %v1289, %v1288
      %v1316 = vpack.c.b16 %v1291, %v1290
      %v1317 = vpack.c.b16 %v1293, %v1292
      %1342 = vmatprep.subr.bf16.mxu0 0
      %1343 = vmatpush1.bf16.msra.mxu0 %v1301
      %1344 = vmatprep.subr.bf16.mxu0 0
      %1345 = vmatpush1.bf16.msra.mxu0 %v1300
      %1346 = vmatprep.subr.bf16.mxu0 0
      %1347 = vmatpush1.bf16.msra.mxu0 %v1299
      %1348 = vmatprep.subr.bf16.mxu0 0
      %1349 = vmatpush1.bf16.msra.mxu0 %v1298
      %1350 = vmatprep.subr.bf16.mxu0 0
      %1351 = vmatpush1.bf16.msra.mxu0 %v1297
      %1352 = vmatprep.subr.bf16.mxu0 0
      %1353 = vmatpush1.bf16.msra.mxu0 %v1296
      %1354 = vmatprep.subr.bf16.mxu0 0
      %1355 = vmatpush1.bf16.msra.mxu0 %v1295
      %1356 = vmatprep.subr.bf16.mxu0 0
      %1357 = vmatpush1.bf16.msra.mxu0 %v1294
      %1358 = vmatprep.subr.bf16.mxu0 0
      %1359 = vmatpush2.bf16.msra.mxu0 %v1309
      %1360 = vmatprep.subr.bf16.mxu0 0
      %1361 = vmatpush2.bf16.msra.mxu0 %v1308
      %1362 = vmatprep.subr.bf16.mxu0 0
      %1363 = vmatpush2.bf16.msra.mxu0 %v1307
      %1364 = vmatprep.subr.bf16.mxu0 0
      %1365 = vmatpush2.bf16.msra.mxu0 %v1306
      %1366 = vmatprep.subr.bf16.mxu0 0
      %1367 = vmatpush2.bf16.msra.mxu0 %v1305
      %1368 = vmatprep.subr.bf16.mxu0 0
      %1369 = vmatpush2.bf16.msra.mxu0 %v1304
      %1370 = vmatprep.subr.bf16.mxu0 0
      %1371 = vmatpush2.bf16.msra.mxu0 %v1303
      %1372 = vmatprep.subr.bf16.mxu0 0
      %1373 = vmatpush2.bf16.msra.mxu0 %v1302
      %1374 = vmatprep.mubr.bf16.mxu0 %v1129
      %1375 = vmatmul.mubr.bf16.gmra.mxu0 %v1186
      %v1376 = vpop.f32.mrf.mxu0
      %v1377 = vadd.f32 %v1196, %v1376
      %v1378 = vpop.f32.mrf.mxu0
      %v1379 = vpop.f32.mrf.mxu0
      %v1380 = vpop.f32.mrf.mxu0
      %1381 = vdwg.mxu0
      %1382 = vmatprep.subr.bf16.mxu0 0
      %1383 = vmatpush1.bf16.msra.mxu0 %v1317
      %1384 = vmatprep.subr.bf16.mxu0 0
      %1385 = vmatpush1.bf16.msra.mxu0 %v1316
      %1386 = vmatprep.subr.bf16.mxu0 0
      %1387 = vmatpush1.bf16.msra.mxu0 %v1315
      %1388 = vmatprep.subr.bf16.mxu0 0
      %1389 = vmatpush1.bf16.msra.mxu0 %v1314
      %1390 = vmatprep.subr.bf16.mxu0 0
      %1391 = vmatpush1.bf16.msra.mxu0 %v1313
      %1392 = vmatprep.subr.bf16.mxu0 0
      %1393 = vmatpush1.bf16.msra.mxu0 %v1312
      %1394 = vmatprep.subr.bf16.mxu0 0
      %1395 = vmatpush1.bf16.msra.mxu0 %v1311
      %1396 = vmatprep.subr.bf16.mxu0 0
      %1397 = vmatpush1.bf16.msra.mxu0 %v1310
      %1398 = vmatprep.subr.bf16.mxu0 0
      %1399 = vmatpush2.bf16.msra.mxu0 0
      %1400 = vmatprep.subr.bf16.mxu0 0
      %1401 = vmatpush2.bf16.msra.mxu0 0
      %1402 = vmatprep.subr.bf16.mxu0 0
      %1403 = vmatpush2.bf16.msra.mxu0 0
      %1404 = vmatprep.subr.bf16.mxu0 0
      %1405 = vmatpush2.bf16.msra.mxu0 0
      %1406 = vmatprep.subr.bf16.mxu0 0
      %1407 = vmatpush2.bf16.msra.mxu0 0
      %1408 = vmatprep.subr.bf16.mxu0 0
      %1409 = vmatpush2.bf16.msra.mxu0 0
      %1410 = vmatprep.subr.bf16.mxu0 0
      %1411 = vmatpush2.bf16.msra.mxu0 0
      %1412 = vmatprep.subr.bf16.mxu0 0
      %1413 = vmatpush2.bf16.msra.mxu0 0
      %1414 = vmatprep.mubr.bf16.mxu0 0
      %1415 = vmatmul.mubr.bf16.gmra.mxu0 %v1190
      %v1416 = vpop.f32.mrf.mxu0
      %v1417 = vadd.f32 %v1377, %v1416
      %v1418 = vpop.f32.mrf.mxu0
      %v1419 = vpop.f32.mrf.mxu0
      %v1420 = vpop.f32.mrf.mxu0
      %1421 = vdwg.mxu0
      %v1422 = vmax.f32 %v1417, 0.0
      %v1423 = vpack.c.bf16 %v1422, %v1422
      %v1424 = vld [vmem:[%s11] sm:$0xf]
      %v1425 = vld [vmem:[%s11 + $0x4] sm:$0xf]
      %v1426 = vld [vmem:[%s11 + $0x8] sm:$0xf]
      %v1427 = vld [vmem:[%s11 + $0xc] sm:$0xf]
      %v1428 = vld [vmem:[%s11 + $0x10] sm:$0xf]
      %v1429 = vld [vmem:[%s11 + $0x14] sm:$0xf]
      %v1430 = vld [vmem:[%s11 + $0x18] sm:$0xf]
      %v1431 = vld [vmem:[%s11 + $0x1c] sm:$0xf]
      %v1432 = vld [vmem:[%s11 + $0x20] sm:$0xf]
      %v1433 = vld [vmem:[%s11 + $0x24] sm:$0xf]
      %v1434 = vld [vmem:[%s11 + $0x28] sm:$0xf]
      %v1435 = vld [vmem:[%s11 + $0x2c] sm:$0xf]
      %v1436 = vld [vmem:[%s11 + $0x30] sm:$0xf]
      %v1437 = vld [vmem:[%s11 + $0x34] sm:$0xf]
      %v1438 = vld [vmem:[%s11 + $0x38] sm:$0xf]
      %v1439 = vld [vmem:[%s11 + $0x3c] sm:$0xf]
      %v1440 = vld [vmem:[%s11 + $0x40] sm:$0xf]
      %v1441 = vld [vmem:[%s11 + $0x44] sm:$0xf]
      %v1442 = vld [vmem:[%s11 + $0x48] sm:$0xf]
      %v1443 = vld [vmem:[%s11 + $0x4c] sm:$0xf]
      %v1444 = vld [vmem:[%s11 + $0x50] sm:$0xf]
      %v1445 = vld [vmem:[%s11 + $0x54] sm:$0xf]
      %v1446 = vld [vmem:[%s11 + $0x58] sm:$0xf]
      %v1447 = vld [vmem:[%s11 + $0x5c] sm:$0xf]
      %v1448 = vld [vmem:[%s11 + $0x60] sm:$0xf]
      %v1449 = vld [vmem:[%s11 + $0x64] sm:$0xf]
      %v1450 = vld [vmem:[%s11 + $0x68] sm:$0xf]
      %v1451 = vld [vmem:[%s11 + $0x6c] sm:$0xf]
      %v1452 = vld [vmem:[%s11 + $0x70] sm:$0xf]
      %v1453 = vld [vmem:[%s11 + $0x74] sm:$0xf]
      %v1454 = vld [vmem:[%s11 + $0x78] sm:$0xf]
      %v1455 = vld [vmem:[%s11 + $0x7c] sm:$0xf]
      %v1456 = vld [vmem:[%s11 + $0x80] sm:$0xf]
      %v1457 = vld [vmem:[%s11 + $0x84] sm:$0xf]
      %v1458 = vld [vmem:[%s11 + $0x88] sm:$0xf]
      %v1459 = vld [vmem:[%s11 + $0x8c] sm:$0xf]
      %v1460 = vld [vmem:[%s11 + $0x90] sm:$0xf]
      %v1461 = vld [vmem:[%s11 + $0x94] sm:$0xf]
      %v1462 = vld [vmem:[%s11 + $0x98] sm:$0xf]
      %v1463 = vld [vmem:[%s11 + $0x9c] sm:$0xf]
      %v1464 = vld [vmem:[%s11 + $0xa0] sm:$0xf]
      %v1465 = vld [vmem:[%s11 + $0xa4] sm:$0xf]
      %v1466 = vld [vmem:[%s11 + $0xa8] sm:$0xf]
      %v1467 = vld [vmem:[%s11 + $0xac] sm:$0xf]
      %v1468 = vld [vmem:[%s11 + $0xb0] sm:$0xf]
      %v1469 = vld [vmem:[%s11 + $0xb4] sm:$0xf]
      %v1470 = vld [vmem:[%s11 + $0xb8] sm:$0xf]
      %v1471 = vld [vmem:[%s11 + $0xbc] sm:$0xf]
      %v1473 = vshrl.u32 %v1423, 16
      %v1475 = vrot.slane %v1473, 7
      %v1476 = vshll.u32 %v1423, 16
      %v1478 = vor.u32 %v1475, %v1476
      %v1480 = vsel %vm491, 0, %v1478
      %v1481 = vrot.slane %v1476, 1
      %v1482 = vor.u32 %v1473, %v1481
      %v1484 = vsel %vm634, %v1482, 0
      %v1533 = vunpack.c.l.b16 %v1424
      %v1534 = vunpack.c.l.b16 %v1425
      %v1535 = vunpack.c.l.b16 %v1426
      %v1536 = vunpack.c.l.b16 %v1427
      %v1537 = vunpack.c.l.b16 %v1428
      %v1538 = vunpack.c.l.b16 %v1429
      %v1539 = vunpack.c.l.b16 %v1430
      %v1540 = vunpack.c.l.b16 %v1431
      %v1541 = vunpack.c.l.b16 %v1432
      %v1542 = vunpack.c.l.b16 %v1433
      %v1543 = vunpack.c.l.b16 %v1434
      %v1544 = vunpack.c.l.b16 %v1435
      %v1545 = vunpack.c.l.b16 %v1436
      %v1546 = vunpack.c.l.b16 %v1437
      %v1547 = vunpack.c.l.b16 %v1438
      %v1548 = vunpack.c.l.b16 %v1439
      %v1549 = vunpack.c.l.b16 %v1440
      %v1550 = vunpack.c.l.b16 %v1441
      %v1551 = vunpack.c.l.b16 %v1442
      %v1552 = vunpack.c.l.b16 %v1443
      %v1553 = vunpack.c.l.b16 %v1444
      %v1554 = vunpack.c.l.b16 %v1445
      %v1555 = vunpack.c.l.b16 %v1446
      %v1556 = vunpack.c.l.b16 %v1447
      %v1557 = vunpack.c.l.b16 %v1448
      %v1558 = vunpack.c.l.b16 %v1449
      %v1559 = vunpack.c.l.b16 %v1450
      %v1560 = vunpack.c.l.b16 %v1451
      %v1561 = vunpack.c.l.b16 %v1452
      %v1562 = vunpack.c.l.b16 %v1453
      %v1563 = vunpack.c.l.b16 %v1454
      %v1564 = vunpack.c.l.b16 %v1455
      %v1565 = vunpack.c.l.b16 %v1456
      %v1566 = vunpack.c.l.b16 %v1457
      %v1567 = vunpack.c.l.b16 %v1458
      %v1568 = vunpack.c.l.b16 %v1459
      %v1569 = vunpack.c.l.b16 %v1460
      %v1570 = vunpack.c.l.b16 %v1461
      %v1571 = vunpack.c.l.b16 %v1462
      %v1572 = vunpack.c.l.b16 %v1463
      %v1573 = vunpack.c.l.b16 %v1464
      %v1574 = vunpack.c.l.b16 %v1465
      %v1575 = vunpack.c.l.b16 %v1466
      %v1576 = vunpack.c.l.b16 %v1467
      %v1577 = vunpack.c.l.b16 %v1468
      %v1578 = vunpack.c.l.b16 %v1469
      %v1579 = vunpack.c.l.b16 %v1470
      %v1580 = vunpack.c.l.b16 %v1471
      %v1581 = vpack.c.b16 %v1534, %v1533
      %v1582 = vpack.c.b16 %v1536, %v1535
      %v1583 = vpack.c.b16 %v1538, %v1537
      %v1584 = vpack.c.b16 %v1540, %v1539
      %v1585 = vpack.c.b16 %v1542, %v1541
      %v1586 = vpack.c.b16 %v1544, %v1543
      %v1587 = vpack.c.b16 %v1546, %v1545
      %v1588 = vpack.c.b16 %v1548, %v1547
      %v1589 = vpack.c.b16 %v1550, %v1549
      %v1590 = vpack.c.b16 %v1552, %v1551
      %v1591 = vpack.c.b16 %v1554, %v1553
      %v1592 = vpack.c.b16 %v1556, %v1555
      %v1593 = vpack.c.b16 %v1558, %v1557
      %v1594 = vpack.c.b16 %v1560, %v1559
      %v1595 = vpack.c.b16 %v1562, %v1561
      %v1596 = vpack.c.b16 %v1564, %v1563
      %v1597 = vpack.c.b16 %v1566, %v1565
      %v1598 = vpack.c.b16 %v1568, %v1567
      %v1599 = vpack.c.b16 %v1570, %v1569
      %v1600 = vpack.c.b16 %v1572, %v1571
      %v1601 = vpack.c.b16 %v1574, %v1573
      %v1602 = vpack.c.b16 %v1576, %v1575
      %v1603 = vpack.c.b16 %v1578, %v1577
      %v1604 = vpack.c.b16 %v1580, %v1579
      %1629 = vmatprep.subr.bf16.mxu0 0
      %1630 = vmatpush1.bf16.msra.mxu0 %v1588
      %1631 = vmatprep.subr.bf16.mxu0 0
      %1632 = vmatpush1.bf16.msra.mxu0 %v1587
      %1633 = vmatprep.subr.bf16.mxu0 0
      %1634 = vmatpush1.bf16.msra.mxu0 %v1586
      %1635 = vmatprep.subr.bf16.mxu0 0
      %1636 = vmatpush1.bf16.msra.mxu0 %v1585
      %1637 = vmatprep.subr.bf16.mxu0 0
      %1638 = vmatpush1.bf16.msra.mxu0 %v1584
      %1639 = vmatprep.subr.bf16.mxu0 0
      %1640 = vmatpush1.bf16.msra.mxu0 %v1583
      %1641 = vmatprep.subr.bf16.mxu0 0
      %1642 = vmatpush1.bf16.msra.mxu0 %v1582
      %1643 = vmatprep.subr.bf16.mxu0 0
      %1644 = vmatpush1.bf16.msra.mxu0 %v1581
      %1645 = vmatprep.subr.bf16.mxu0 0
      %1646 = vmatpush2.bf16.msra.mxu0 %v1596
      %1647 = vmatprep.subr.bf16.mxu0 0
      %1648 = vmatpush2.bf16.msra.mxu0 %v1595
      %1649 = vmatprep.subr.bf16.mxu0 0
      %1650 = vmatpush2.bf16.msra.mxu0 %v1594
      %1651 = vmatprep.subr.bf16.mxu0 0
      %1652 = vmatpush2.bf16.msra.mxu0 %v1593
      %1653 = vmatprep.subr.bf16.mxu0 0
      %1654 = vmatpush2.bf16.msra.mxu0 %v1592
      %1655 = vmatprep.subr.bf16.mxu0 0
      %1656 = vmatpush2.bf16.msra.mxu0 %v1591
      %1657 = vmatprep.subr.bf16.mxu0 0
      %1658 = vmatpush2.bf16.msra.mxu0 %v1590
      %1659 = vmatprep.subr.bf16.mxu0 0
      %1660 = vmatpush2.bf16.msra.mxu0 %v1589
      %1661 = vmatprep.mubr.bf16.mxu0 %v1423
      %1662 = vmatmul.mubr.bf16.gmra.mxu0 %v1480
      %v1663 = vpop.f32.mrf.mxu0
      %v1664 = vadd.f32 0.0, %v1663
      %v1665 = vpop.f32.mrf.mxu0
      %v1666 = vpop.f32.mrf.mxu0
      %v1667 = vpop.f32.mrf.mxu0
      %1668 = vdwg.mxu0
      %1669 = vmatprep.subr.bf16.mxu0 0
      %1670 = vmatpush1.bf16.msra.mxu0 %v1604
      %1671 = vmatprep.subr.bf16.mxu0 0
      %1672 = vmatpush1.bf16.msra.mxu0 %v1603
      %1673 = vmatprep.subr.bf16.mxu0 0
      %1674 = vmatpush1.bf16.msra.mxu0 %v1602
      %1675 = vmatprep.subr.bf16.mxu0 0
      %1676 = vmatpush1.bf16.msra.mxu0 %v1601
      %1677 = vmatprep.subr.bf16.mxu0 0
      %1678 = vmatpush1.bf16.msra.mxu0 %v1600
      %1679 = vmatprep.subr.bf16.mxu0 0
      %1680 = vmatpush1.bf16.msra.mxu0 %v1599
      %1681 = vmatprep.subr.bf16.mxu0 0
      %1682 = vmatpush1.bf16.msra.mxu0 %v1598
      %1683 = vmatprep.subr.bf16.mxu0 0
      %1684 = vmatpush1.bf16.msra.mxu0 %v1597
      %1685 = vmatprep.subr.bf16.mxu0 0
      %1686 = vmatpush2.bf16.msra.mxu0 0
      %1687 = vmatprep.subr.bf16.mxu0 0
      %1688 = vmatpush2.bf16.msra.mxu0 0
      %1689 = vmatprep.subr.bf16.mxu0 0
      %1690 = vmatpush2.bf16.msra.mxu0 0
      %1691 = vmatprep.subr.bf16.mxu0 0
      %1692 = vmatpush2.bf16.msra.mxu0 0
      %1693 = vmatprep.subr.bf16.mxu0 0
      %1694 = vmatpush2.bf16.msra.mxu0 0
      %1695 = vmatprep.subr.bf16.mxu0 0
      %1696 = vmatpush2.bf16.msra.mxu0 0
      %1697 = vmatprep.subr.bf16.mxu0 0
      %1698 = vmatpush2.bf16.msra.mxu0 0
      %1699 = vmatprep.subr.bf16.mxu0 0
      %1700 = vmatpush2.bf16.msra.mxu0 0
      %1701 = vmatprep.mubr.bf16.mxu0 0
      %1702 = vmatmul.mubr.bf16.gmra.mxu0 %v1484
      %v1703 = vpop.f32.mrf.mxu0
      %v1704 = vadd.f32 %v1664, %v1703
      %v1705 = vpop.f32.mrf.mxu0
      %v1706 = vpop.f32.mrf.mxu0
      %v1707 = vpop.f32.mrf.mxu0
      %1708 = vdwg.mxu0
      %v1721 = vunpack.c.l.b16 %v608
      %v1722 = vunpack.c.l.b16 %v609
      %v1723 = vunpack.c.l.b16 %v610
      %v1724 = vunpack.c.l.b16 %v611
      %v1725 = vunpack.c.l.b16 %v612
      %v1726 = vunpack.c.l.b16 %v613
      %v1727 = vunpack.c.l.b16 %v614
      %v1728 = vunpack.c.l.b16 %v615
      %v1729 = vunpack.c.l.b16 %v616
      %v1730 = vunpack.c.l.b16 %v617
      %v1731 = vunpack.c.l.b16 %v618
      %v1732 = vunpack.c.l.b16 %v619
      %v1733 = vpack.c.b16 %v1722, %v1721
      %v1734 = vpack.c.b16 %v1724, %v1723
      %v1735 = vpack.c.b16 %v1726, %v1725
      %v1736 = vpack.c.b16 %v1728, %v1727
      %v1737 = vpack.c.b16 %v1730, %v1729
      %v1738 = vpack.c.b16 %v1732, %v1731
      %1745 = vmatprep.subr.bf16.mxu0 0
      %1746 = vmatpush1.bf16.msra.mxu0 0
      %1747 = vmatprep.subr.bf16.mxu0 0
      %1748 = vmatpush1.bf16.msra.mxu0 0
      %1749 = vmatprep.subr.bf16.mxu0 0
      %1750 = vmatpush1.bf16.msra.mxu0 %v1738
      %1751 = vmatprep.subr.bf16.mxu0 0
      %1752 = vmatpush1.bf16.msra.mxu0 %v1737
      %1753 = vmatprep.subr.bf16.mxu0 0
      %1754 = vmatpush1.bf16.msra.mxu0 %v1736
      %1755 = vmatprep.subr.bf16.mxu0 0
      %1756 = vmatpush1.bf16.msra.mxu0 %v1735
      %1757 = vmatprep.subr.bf16.mxu0 0
      %1758 = vmatpush1.bf16.msra.mxu0 %v1734
      %1759 = vmatprep.subr.bf16.mxu0 0
      %1760 = vmatpush1.bf16.msra.mxu0 %v1733
      %1761 = vmatprep.subr.bf16.mxu0 0
      %1762 = vmatpush2.bf16.msra.mxu0 0
      %1763 = vmatprep.subr.bf16.mxu0 0
      %1764 = vmatpush2.bf16.msra.mxu0 0
      %1765 = vmatprep.subr.bf16.mxu0 0
      %1766 = vmatpush2.bf16.msra.mxu0 0
      %1767 = vmatprep.subr.bf16.mxu0 0
      %1768 = vmatpush2.bf16.msra.mxu0 0
      %1769 = vmatprep.subr.bf16.mxu0 0
      %1770 = vmatpush2.bf16.msra.mxu0 0
      %1771 = vmatprep.subr.bf16.mxu0 0
      %1772 = vmatpush2.bf16.msra.mxu0 0
      %1773 = vmatprep.subr.bf16.mxu0 0
      %1774 = vmatpush2.bf16.msra.mxu0 0
      %1775 = vmatprep.subr.bf16.mxu0 0
      %1776 = vmatpush2.bf16.msra.mxu0 0
      %1777 = vmatprep.mubr.bf16.mxu0 0
      %1778 = vmatmul.mubr.bf16.gmra.mxu0 %v704
      %v1779 = vpop.f32.mrf.mxu0
      %v1780 = vadd.f32 %v1028, %v1779
      %v1781 = vpop.f32.mrf.mxu0
      %v1782 = vpop.f32.mrf.mxu0
      %v1783 = vpop.f32.mrf.mxu0
      %1784 = vdwg.mxu0
      %v1785 = vadd.f32 %v1780, %v1704
      %v1786 = vld [vmem:[%s12] sm:$0x1]
      %v1788 = vlaneseq
      %v1789 = vshrl.u32 %v1788, 7
      %v1790 = vsub.s32 0, %v1789
      %v1791 = vrot.slane %v1786, %v1790
      %v1793 = vadd.f32 %v1785, %v1791
      %v1794 = vmax.f32 %v1793, 0.0
      %v1796 = vrot.slane %v1794, 4
      %1797 = vrot.lane.b32.xlu0 %v1796, 64
      %v1798 = vpop.permute.xlu0 %1797
      %v1800 = vsel %vm563, %v1794, %v1798
      %1801 = vst [vmem:[%s438] sm:$0xf] %v1800
      %p1802 = scmp.lt.s32.totalorder %s24, 1
      %s1803 = scalar_select %p1802, %s24, 1
      %s1804 = smul.addr %s1803, 4
      %s1805 = scalar_lea.vmem %s13, %s1804
      // Predicated region
      $region73: #{_lambda_.1} parent=71 // pred_check
        %p1806 = pneg %p320
      $region74: #{_lambda_.1} parent=71 // pred_check_branch
        %1808 = sbr.rel (%p1806) target = $region76
      $region75: #{_lambda_.1} parent=71 // pred_region
        _
      $region76: #{_lambda_.1} parent=71 // pred_fallthru
        _
    $region72: #{_lambda_.1} parent=5 // pred_fallthru
      _
    %p1809 = scmp.le.s32.totalorder 2, %s19
    // Predicated region
    $region77: #{_lambda_.1} parent=5 // pred_check
      %p1810 = pneg %p1809
    $region78: #{_lambda_.1} parent=5 // pred_check_branch
      %1812 = sbr.rel (%p1810) target = $region80
    $region79: #{_lambda_.1} parent=5 // pred_region
      %s1813 = ssub.s32 %s19, 2
      // Predicated region
      $region81: #{_lambda_.1} parent=79 // pred_check
        %p1814 = pneg %p326
      $region82: #{_lambda_.1} parent=79 // pred_check_branch
        %1816 = sbr.rel (%p1814) target = $region84
      $region83: #{_lambda_.1} parent=79 // pred_region
        %p1817 = scmp.lt.s32.totalorder %s25, 1
        %s1818 = scalar_select %p1817, %s25, 1
        %s1819 = smul.addr %s1818, 4
        %s1820 = scalar_lea.vmem %s13, %s1819
      $region84: #{_lambda_.1} parent=79 // pred_fallthru
        _
    $region80: #{_lambda_.1} parent=5 // pred_fallthru
      _
  $region6: #{_lambda_.1} parent=0 // loop_footer
    %s23 = sadd.s32 1, %s19
  $region7: #{_lambda_.1} parent=0 // loop_footer_branch
    %18 = sbr.rel target = $region3
  $region8: #{_lambda_.1} parent=0 // loop_exit
    _

</llo_original>
